<compile_context>
chip_gen: v7x
topology: tpu7x:2x2x1
jax: 0.10.0
libtpu: 0.0.40
codegen_flags: <defaults>
</compile_context>

<pallas_src>
import functools
import math

import jax
import jax.numpy as jnp
from jax.experimental import pallas as pl
from jax.experimental.pallas import tpu as pltpu


def _split_heads(x, num_heads, dh):
  # (rows, D) -> (H, rows, dh); static lane slices + stack (safe Mosaic relayout)
  return jnp.stack([x[:, h * dh:(h + 1) * dh] for h in range(num_heads)], axis=0)


def _merge_heads(x_h, num_heads):
  # (H, rows, dh) -> (rows, H*dh): single repack so the out-projection runs as
  # one full-K matmul instead of H K=dh matmuls summed on the VPU.
  return jnp.concatenate([x_h[h] for h in range(num_heads)], axis=-1)


# --------------------------------------------------------------------------
# Pass 1: per-batch row/col-sum maxima of attn2 (Moore-Penrose init denominator)
# --------------------------------------------------------------------------
def _pinv_denom_kernel(tgt_ref, wq_ref, wk_ref, row_ref, col_ref,
                       *, num_heads, num_landmarks):
  f32, bf16 = jnp.float32, jnp.bfloat16
  n, D = tgt_ref.shape[1], tgt_ref.shape[2]
  H = num_heads
  dh = D // H
  m = num_landmarks
  l = n // m

  x_bf = tgt_ref[0].astype(bf16)                                   # (n, D)
  q = jnp.dot(x_bf, wq_ref[...], preferred_element_type=f32)       # q pre-scaled
  k = jnp.dot(x_bf, wk_ref[...], preferred_element_type=f32)

  # landmark pooling commutes with the head split -> pool flat, then split
  q_l = _split_heads(jnp.mean(q.reshape(m, l, D), axis=1), H, dh).astype(bf16)
  k_l = _split_heads(jnp.mean(k.reshape(m, l, D), axis=1), H, dh).astype(bf16)

  sim2 = jnp.einsum('hid,hjd->hij', q_l, k_l, preferred_element_type=f32)
  mx = jnp.max(sim2, axis=-1, keepdims=True)
  e = jnp.exp(sim2 - mx)
  attn2 = e / jnp.sum(e, axis=-1, keepdims=True)                   # exact softmax

  abs2 = jnp.abs(attn2)
  row_sums = jnp.sum(abs2, axis=-1)                                # (H, m)
  col_sums = jnp.sum(abs2, axis=-2)                                # (H, m)
  rmax = jnp.max(jnp.max(row_sums, axis=-1, keepdims=True), axis=0, keepdims=True)
  cmax = jnp.max(jnp.max(col_sums, axis=-1, keepdims=True), axis=0, keepdims=True)
  row_ref[...] = rmax.reshape(1, 1, 1)
  col_ref[...] = cmax.reshape(1, 1, 1)


# --------------------------------------------------------------------------
# Pass 2: full decoder layer, one batch element per grid step
# --------------------------------------------------------------------------
def _decoder_layer_kernel(
    denom_ref, tgt_ref, mem_ref,
    wq_n_ref, wk_n_ref, wv_n_ref, w_no_ref, b_no_ref, band_ref,
    wq_c_ref, wk_c_ref, wv_c_ref, bq_c_ref, bk_c_ref, bv_c_ref,
    w_mo_ref, b_mo_ref,
    w1_ref, b1_ref, w2_ref, b2_ref,
    lnw_ref, lnb_ref,
    out_ref,
    *, num_heads, num_landmarks, pinv_iters):
  f32, bf16 = jnp.float32, jnp.bfloat16
  n, D = tgt_ref.shape[1], tgt_ref.shape[2]
  H = num_heads
  dh = D // H
  m = num_landmarks
  l = n // m

  def softmax(x, axis=-1, approx=True):
    mx = jnp.max(x, axis=axis, keepdims=True)
    e = jnp.exp(x - mx)
    s = jnp.sum(e, axis=axis, keepdims=True)
    if approx:
      return e * pl.reciprocal(s, approx=True)
    return e / s

  def layernorm(x2d, idx):
    w = lnw_ref[idx:idx + 1, :]
    b = lnb_ref[idx:idx + 1, :]
    mu = jnp.mean(x2d, axis=-1, keepdims=True)
    xc = x2d - mu
    var = jnp.mean(xc * xc, axis=-1, keepdims=True)
    return xc * jax.lax.rsqrt(var + 1e-5) * w + b

  x2 = tgt_ref[0]                                # (n, D) f32 (residual path)
  x_bf = x2.astype(bf16)

  # ---------------- Nystrom self-attention ----------------
  q = jnp.dot(x_bf, wq_n_ref[...], preferred_element_type=f32)    # scale folded in
  k = jnp.dot(x_bf, wk_n_ref[...], preferred_element_type=f32)
  v = jnp.dot(x_bf, wv_n_ref[...], preferred_element_type=f32)

  # landmark pooling (mean over groups of l tokens) done flat, then head split
  q_l = jnp.mean(q.reshape(m, l, D), axis=1)     # (m, D)
  k_l = jnp.mean(k.reshape(m, l, D), axis=1)

  q_h = _split_heads(q, H, dh).astype(bf16)      # (H, n, dh)
  k_h = _split_heads(k, H, dh).astype(bf16)
  v_hb = _split_heads(v, H, dh).astype(bf16)
  q_lh = _split_heads(q_l, H, dh).astype(bf16)   # (H, m, dh)
  k_lh = _split_heads(k_l, H, dh).astype(bf16)

  sim1 = jnp.einsum('hnd,hmd->hnm', q_h, k_lh, preferred_element_type=f32)
  sim2 = jnp.einsum('hid,hjd->hij', q_lh, k_lh, preferred_element_type=f32)
  sim2t = jnp.einsum('hid,hjd->hij', k_lh, q_lh, preferred_element_type=f32)  # sim2^T
  sim3 = jnp.einsum('hmd,hnd->hmn', q_lh, k_h, preferred_element_type=f32)

  attn1 = softmax(sim1)                          # approx recip ok
  attn2 = softmax(sim2, approx=False)            # exact: feeds Newton iteration
  attn2_t = softmax(sim2t, axis=-2, approx=False)  # == softmax(sim2)^T, no transpose
  attn3 = softmax(sim3)

  inv_denom = 1.0 / denom_ref[0, 0]              # global scalar from pass 1
  z = attn2_t * inv_denom                        # (H, m, m) f32

  rr = jax.lax.broadcasted_iota(jnp.int32, (m, m), 0)
  cc = jax.lax.broadcasted_iota(jnp.int32, (m, m), 1)
  eye = (rr == cc).astype(f32)

  def bmm(a, b):
    return jnp.einsum('hij,hjk->hik', a, b, preferred_element_type=f32)

  for _ in range(pinv_iters):                    # keep f32: Newton stability
    xz = bmm(attn2, z)
    t1 = 7.0 * eye - xz
    t2 = 15.0 * eye - bmm(xz, t1)
    t3 = 13.0 * eye - bmm(xz, t2)
    z = 0.25 * bmm(z, t3)

  av = jnp.einsum('hmn,hnd->hmd', attn3.astype(bf16), v_hb,
                  preferred_element_type=f32)                       # (H, m, dh)
  az = jnp.einsum('hnm,hmk->hnk', attn1.astype(bf16), z.astype(bf16),
                  preferred_element_type=f32)                       # (H, n, m)
  out_h = jnp.einsum('hnm,hmd->hnd', az.astype(bf16), av.astype(bf16),
                     preferred_element_type=f32)                    # (H, n, dh)

  # depthwise residual conv along seq: un-replicated (H, n, n) bf16 band
  res = jnp.einsum('hnm,hmd->hnd', band_ref[...], v_hb,
                   preferred_element_type=f32)

  merged = _merge_heads(out_h + res, H).astype(bf16)                # (n, D)
  tgt2 = jnp.dot(merged, w_no_ref[...], preferred_element_type=f32) + b_no_ref[...]
  t = layernorm(x2 + tgt2, 0)                                       # norm1

  # ---------------- cross multi-head attention ----------------
  mem_bf = mem_ref[0]                                               # (S, D) bf16
  t_bf = t.astype(bf16)
  qc = jnp.dot(t_bf, wq_c_ref[...], preferred_element_type=f32) + bq_c_ref[...]
  kc = jnp.dot(mem_bf, wk_c_ref[...], preferred_element_type=f32) + bk_c_ref[...]
  vc = jnp.dot(mem_bf, wv_c_ref[...], preferred_element_type=f32) + bv_c_ref[...]

  qc_h = _split_heads(qc, H, dh).astype(bf16)                       # (H, n, dh)
  kc_h = _split_heads(kc, H, dh).astype(bf16)                       # (H, S, dh)
  vc_h = _split_heads(vc, H, dh).astype(bf16)

  p = softmax(jnp.einsum('hnd,hsd->hns', qc_h, kc_h, preferred_element_type=f32))
  c_h = jnp.einsum('hns,hsd->hnd', p.astype(bf16), vc_h, preferred_element_type=f32)
  cro = jnp.dot(_merge_heads(c_h, H).astype(bf16), w_mo_ref[...],
                preferred_element_type=f32) + b_mo_ref[...]
  t = layernorm(t + cro, 1)                                         # norm2

  # ---------------- feed-forward ----------------
  ff = jnp.dot(t.astype(bf16), w1_ref[...], preferred_element_type=f32) + b1_ref[...]
  ff = jnp.maximum(ff, 0.0)
  ff = jnp.dot(ff.astype(bf16), w2_ref[...], preferred_element_type=f32) + b2_ref[...]
  t = layernorm(t + ff, 2)                                          # norm3

  out_ref[0] = t


def _vmem_limit_bytes():
  try:
    cap = int(pltpu.get_tpu_info().vmem_capacity_bytes)
  except Exception:
    cap = 64 * 1024 * 1024          # conservative: v7x physical VMEM per core
  # leave headroom for Mosaic-internal scratch; cap the benefit on 128 MiB parts
  return int(min(max(cap - 16 * 1024 * 1024, 32 * 1024 * 1024), 100 * 1024 * 1024))


def custom_transformer_decoder_layer(tgt, memory, params, *, num_heads,
                                     num_landmarks, pinv_iters=6):
  B, n, D = tgt.shape
  S = memory.shape[1]
  m = num_landmarks
  assert n % m == 0, "seq len must be a multiple of num_landmarks"
  assert D % num_heads == 0
  H = num_heads
  dh = D // H
  conv_k = params['nys_conv_w'].shape[2]
  pad = conv_k // 2
  f32, bf16 = jnp.float32, jnp.bfloat16

  # ----- one-time weight re-layout (transposed so kernel computes x @ W.T) -----
  scale = dh ** -0.5
  qkv_w = params['nys_qkv_w'].astype(f32)                      # (3D, D)
  wq_n = (qkv_w[0:D].T * scale).astype(bf16)                   # scale folded into q
  wk_n = qkv_w[D:2 * D].T.astype(bf16)
  wv_n = qkv_w[2 * D:3 * D].T.astype(bf16)

  w_no = params['nys_out_w'].T.astype(bf16)                    # (D, D)
  b_no = params['nys_out_b'].reshape(1, D).astype(f32)

  # banded matrix reproducing the depthwise (conv_k,1) zero-padded conv, bf16,
  # NOT replicated over batch (contracted per grid step against (H, n, dh) v)
  conv_w = params['nys_conv_w'].reshape(H, conv_k).astype(f32)
  idx = jnp.arange(n)
  rel = idx[None, :] - idx[:, None] + pad                      # (n, n)
  valid = (rel >= 0) & (rel < conv_k)
  relc = jnp.clip(rel, 0, conv_k - 1)
  band = jnp.where(valid[None, :, :], conv_w[:, relc], 0.0).astype(bf16)   # (H,n,n)

  in_w = params['mha_in_w'].astype(f32)
  in_b = params['mha_in_b'].astype(f32)
  mha_scale = 1.0 / math.sqrt(dh)
  wq_c = (in_w[0:D].T * mha_scale).astype(bf16)                # scale folded in
  wk_c = in_w[D:2 * D].T.astype(bf16)
  wv_c = in_w[2 * D:3 * D].T.astype(bf16)
  bq_c = (in_b[0:D] * mha_scale).reshape(1, D).astype(f32)
  bk_c = in_b[D:2 * D].reshape(1, D).astype(f32)
  bv_c = in_b[2 * D:3 * D].reshape(1, D).astype(f32)
  w_mo = params['mha_out_w'].T.astype(bf16)
  b_mo = params['mha_out_b'].reshape(1, D).astype(f32)

  w1 = params['lin1_w'].T.astype(bf16)
  b1 = params['lin1_b'].reshape(1, -1).astype(f32)
  w2 = params['lin2_w'].T.astype(bf16)
  b2 = params['lin2_b'].reshape(1, D).astype(f32)

  ln_w = params['ln_w'].astype(f32)    # (3, D)
  ln_b = params['ln_b'].astype(f32)    # (3, D)

  tgt_f32 = tgt.astype(f32)
  mem_bf16 = memory.astype(bf16)       # memory only ever feeds bf16 GEMMs

  vmem = pl.BlockSpec(memory_space=pltpu.MemorySpace.VMEM)
  smem = pl.BlockSpec(memory_space=pltpu.MemorySpace.SMEM)
  vmem_limit = _vmem_limit_bytes()

  # ---- pass 1: global Moore-Penrose init denominator (batch-parallel) ----
  row_max, col_max = pl.pallas_call(
      functools.partial(_pinv_denom_kernel, num_heads=H, num_landmarks=m),
      grid=(B,),
      in_specs=[pl.BlockSpec((1, n, D), lambda b: (b, 0, 0)), vmem, vmem],
      out_specs=(pl.BlockSpec((1, 1, 1), lambda b: (b, 0, 0)),
                 pl.BlockSpec((1, 1, 1), lambda b: (b, 0, 0))),
      out_shape=(jax.ShapeDtypeStruct((B, 1, 1), f32),
                 jax.ShapeDtypeStruct((B, 1, 1), f32)),
      compiler_params=pltpu.CompilerParams(
          dimension_semantics=("parallel",), vmem_limit_bytes=vmem_limit),
  )(tgt_f32, wq_n, wk_n)
  # torch.max(col) * torch.max(row): global over batch AND heads
  denom = (jnp.max(row_max) * jnp.max(col_max)).reshape(1, 1).astype(f32)

  # ---- pass 2: full decoder layer, batch-parallel, denom as SMEM scalar ----
  kernel = functools.partial(
      _decoder_layer_kernel, num_heads=H, num_landmarks=m, pinv_iters=pinv_iters)

  return pl.pallas_call(
      kernel,
      grid=(B,),
      in_specs=[smem,
                pl.BlockSpec((1, n, D), lambda b: (b, 0, 0)),
                pl.BlockSpec((1, S, D), lambda b: (b, 0, 0))] + [vmem] * 20,
      out_specs=pl.BlockSpec((1, n, D), lambda b: (b, 0, 0)),
      out_shape=jax.ShapeDtypeStruct((B, n, D), f32),
      compiler_params=pltpu.CompilerParams(
          dimension_semantics=("parallel",), vmem_limit_bytes=vmem_limit),
  )(denom, tgt_f32, mem_bf16,
    wq_n, wk_n, wv_n, w_no, b_no, band,
    wq_c, wk_c, wv_c, bq_c, bk_c, bv_c,
    w_mo, b_mo,
    w1, b1, w2, b2,
    ln_w, ln_b)


if __name__ == "__main__":
  B, n, S, D = 2, 16, 16, 64
  num_heads, num_landmarks, conv_k = 4, 8, 33

  key = jax.random.PRNGKey(0)
  ks = jax.random.split(key, 16)

  def rnd(k, shape, s=0.2):
    return s * jax.random.normal(k, shape, dtype=jnp.float32)

  tgt = jax.random.normal(ks[0], (B, n, D), dtype=jnp.float32)
  memory = jax.random.normal(ks[1], (B, S, D), dtype=jnp.float32)

  params = dict(
      nys_qkv_w=rnd(ks[2], (3 * D, D)),                  # to_qkv (no bias)
      nys_out_w=rnd(ks[3], (D, D)),                      # to_out Linear
      nys_out_b=rnd(ks[4], (D,)),
      nys_conv_w=rnd(ks[5], (num_heads, 1, conv_k, 1)),  # depthwise res_conv
      mha_in_w=rnd(ks[6], (3 * D, D)),                   # MultiheadAttention in_proj
      mha_in_b=rnd(ks[7], (3 * D,)),
      mha_out_w=rnd(ks[8], (D, D)),
      mha_out_b=rnd(ks[9], (D,)),
      lin1_w=rnd(ks[10], (D, D)),
      lin1_b=rnd(ks[11], (D,)),
      lin2_w=rnd(ks[12], (D, D)),
      lin2_b=rnd(ks[13], (D,)),
      ln_w=1.0 + rnd(ks[14], (3, D), 0.05),
      ln_b=rnd(ks[15], (3, D), 0.05),
  )

  out = custom_transformer_decoder_layer(
      tgt, memory, params, num_heads=num_heads, num_landmarks=num_landmarks)
  out = jax.block_until_ready(out)
  assert out.shape == (B, n, D)
  assert bool(jnp.all(jnp.isfinite(out)))
  print("KERNEL_OK")
</pallas_src>

<mosaic_0001>
module attributes {stable_mosaic.version = 11 : i64} {
  func.func @_pinv_denom_kernel(%arg0: i32, %arg1: memref<1x16x64xf32, #tpu.memory_space<vmem>>, %arg2: memref<64x64xbf16, #tpu.memory_space<vmem>>, %arg3: memref<64x64xbf16, #tpu.memory_space<vmem>>, %arg4: memref<1x1x1xf32, #tpu.memory_space<vmem>>, %arg5: memref<1x1x1xf32, #tpu.memory_space<vmem>>) attributes {dimension_semantics = [#tpu.dimension_semantics<parallel>], iteration_bounds = array<i64: 2>, scalar_prefetch = 0 : i64, scratch_operands = 0 : i64, tpu.core_type = #tpu.core_type<tc>, window_params = [{transform_indices = @transform_0, window_bounds = array<i64: 1, 16, 64>}, {pipeline_mode = #tpu.pipeline_mode<synchronous>, transform_indices = @transform_1, window_bounds = array<i64: 64, 64>}, {pipeline_mode = #tpu.pipeline_mode<synchronous>, transform_indices = @transform_2, window_bounds = array<i64: 64, 64>}, {transform_indices = @transform_3, window_bounds = array<i64: 1, 1, 1>}, {transform_indices = @transform_4, window_bounds = array<i64: 1, 1, 1>}]} {
    %c0 = arith.constant 0 : index
    %c0_0 = arith.constant 0 : index
    %c0_1 = arith.constant 0 : index
    %0 = vector.load %arg1[%c0, %c0_0, %c0_1] : memref<1x16x64xf32, #tpu.memory_space<vmem>>, vector<1x16x64xf32>
    %1 = vector.shape_cast %0 : vector<1x16x64xf32> to vector<16x64xf32>
    %2 = arith.truncf %1 : vector<16x64xf32> to vector<16x64xbf16>
    %c0_2 = arith.constant 0 : index
    %c0_3 = arith.constant 0 : index
    %3 = vector.load %arg2[%c0_2, %c0_3] : memref<64x64xbf16, #tpu.memory_space<vmem>>, vector<64x64xbf16>
    %cst = arith.constant dense<0.000000e+00> : vector<16x64xf32>
    %4 = tpu.matmul %2, %3, %cst {dimension_numbers = #tpu.dot_dimension_numbers<[1], [0], [0], [1], [0, 0, 1, 1], [], []>} : vector<16x64xbf16>, vector<64x64xbf16>, vector<16x64xf32> -> vector<16x64xf32>
    %c0_4 = arith.constant 0 : index
    %c0_5 = arith.constant 0 : index
    %5 = vector.load %arg3[%c0_4, %c0_5] : memref<64x64xbf16, #tpu.memory_space<vmem>>, vector<64x64xbf16>
    %cst_6 = arith.constant dense<0.000000e+00> : vector<16x64xf32>
    %6 = tpu.matmul %2, %5, %cst_6 {dimension_numbers = #tpu.dot_dimension_numbers<[1], [0], [0], [1], [0, 0, 1, 1], [], []>} : vector<16x64xbf16>, vector<64x64xbf16>, vector<16x64xf32> -> vector<16x64xf32>
    %7 = vector.shape_cast %4 : vector<16x64xf32> to vector<8x2x64xf32>
    %cst_7 = arith.constant dense<0.000000e+00> : vector<8x64xf32>
    %8 = vector.multi_reduction <add>, %7, %cst_7 [1] : vector<8x2x64xf32> to vector<8x64xf32>
    %cst_8 = arith.constant 2.000000e+00 : f32
    %9 = vector.broadcast %cst_8 : f32 to vector<8x64xf32>
    %10 = arith.divf %8, %9 : vector<8x64xf32>
    %11 = vector.extract_strided_slice %10 {offsets = [0, 0], sizes = [8, 16], strides = [1, 1]} : vector<8x64xf32> to vector<8x16xf32>
    %12 = vector.extract_strided_slice %10 {offsets = [0, 16], sizes = [8, 16], strides = [1, 1]} : vector<8x64xf32> to vector<8x16xf32>
    %13 = vector.extract_strided_slice %10 {offsets = [0, 32], sizes = [8, 16], strides = [1, 1]} : vector<8x64xf32> to vector<8x16xf32>
    %14 = vector.extract_strided_slice %10 {offsets = [0, 48], sizes = [8, 16], strides = [1, 1]} : vector<8x64xf32> to vector<8x16xf32>
    %15 = vector.shape_cast %11 : vector<8x16xf32> to vector<1x8x16xf32>
    %16 = vector.shape_cast %12 : vector<8x16xf32> to vector<1x8x16xf32>
    %17 = vector.shape_cast %13 : vector<8x16xf32> to vector<1x8x16xf32>
    %18 = vector.shape_cast %14 : vector<8x16xf32> to vector<1x8x16xf32>
    %19 = tpu.concatenate %15, %16, %17, %18 in 0 : vector<1x8x16xf32>, vector<1x8x16xf32>, vector<1x8x16xf32>, vector<1x8x16xf32> -> vector<4x8x16xf32>
    %20 = arith.truncf %19 : vector<4x8x16xf32> to vector<4x8x16xbf16>
    %21 = vector.shape_cast %6 : vector<16x64xf32> to vector<8x2x64xf32>
    %cst_9 = arith.constant dense<0.000000e+00> : vector<8x64xf32>
    %22 = vector.multi_reduction <add>, %21, %cst_9 [1] : vector<8x2x64xf32> to vector<8x64xf32>
    %cst_10 = arith.constant 2.000000e+00 : f32
    %23 = vector.broadcast %cst_10 : f32 to vector<8x64xf32>
    %24 = arith.divf %22, %23 : vector<8x64xf32>
    %25 = vector.extract_strided_slice %24 {offsets = [0, 0], sizes = [8, 16], strides = [1, 1]} : vector<8x64xf32> to vector<8x16xf32>
    %26 = vector.extract_strided_slice %24 {offsets = [0, 16], sizes = [8, 16], strides = [1, 1]} : vector<8x64xf32> to vector<8x16xf32>
    %27 = vector.extract_strided_slice %24 {offsets = [0, 32], sizes = [8, 16], strides = [1, 1]} : vector<8x64xf32> to vector<8x16xf32>
    %28 = vector.extract_strided_slice %24 {offsets = [0, 48], sizes = [8, 16], strides = [1, 1]} : vector<8x64xf32> to vector<8x16xf32>
    %29 = vector.shape_cast %25 : vector<8x16xf32> to vector<1x8x16xf32>
    %30 = vector.shape_cast %26 : vector<8x16xf32> to vector<1x8x16xf32>
    %31 = vector.shape_cast %27 : vector<8x16xf32> to vector<1x8x16xf32>
    %32 = vector.shape_cast %28 : vector<8x16xf32> to vector<1x8x16xf32>
    %33 = tpu.concatenate %29, %30, %31, %32 in 0 : vector<1x8x16xf32>, vector<1x8x16xf32>, vector<1x8x16xf32>, vector<1x8x16xf32> -> vector<4x8x16xf32>
    %34 = arith.truncf %33 : vector<4x8x16xf32> to vector<4x8x16xbf16>
    "tpu.trace_start"() <{level = 10 : i32, message = "hid,hjd->hij"}> : () -> ()
    %cst_11 = arith.constant dense<0.000000e+00> : vector<4x8x8xf32>
    %35 = tpu.matmul %20, %34, %cst_11 {dimension_numbers = #tpu.dot_dimension_numbers<[2], [2], [1], [1], [0, 0, 0, 1, 1, 1], [0], [0]>} : vector<4x8x16xbf16>, vector<4x8x16xbf16>, vector<4x8x8xf32> -> vector<4x8x8xf32>
    "tpu.trace_stop"() : () -> ()
    %cst_12 = arith.constant dense<0xFF800000> : vector<4x8xf32>
    %36 = vector.multi_reduction <maximumf>, %35, %cst_12 [2] : vector<4x8x8xf32> to vector<4x8xf32>
    %37 = vector.shape_cast %36 : vector<4x8xf32> to vector<4x8x1xf32>
    %38 = vector.broadcast %37 : vector<4x8x1xf32> to vector<4x8x8xf32>
    %39 = arith.subf %35, %38 : vector<4x8x8xf32>
    %40 = math.exp %39 : vector<4x8x8xf32>
    %cst_13 = arith.constant dense<0.000000e+00> : vector<4x8xf32>
    %41 = vector.multi_reduction <add>, %40, %cst_13 [2] : vector<4x8x8xf32> to vector<4x8xf32>
    %42 = vector.shape_cast %41 : vector<4x8xf32> to vector<4x8x1xf32>
    %43 = vector.broadcast %42 : vector<4x8x1xf32> to vector<4x8x8xf32>
    %44 = arith.divf %40, %43 : vector<4x8x8xf32>
    %45 = math.absf %44 : vector<4x8x8xf32>
    %cst_14 = arith.constant dense<0.000000e+00> : vector<4x8xf32>
    %46 = vector.multi_reduction <add>, %45, %cst_14 [2] : vector<4x8x8xf32> to vector<4x8xf32>
    %cst_15 = arith.constant dense<0.000000e+00> : vector<4x8xf32>
    %47 = vector.multi_reduction <add>, %45, %cst_15 [1] : vector<4x8x8xf32> to vector<4x8xf32>
    %cst_16 = arith.constant dense<0xFF800000> : vector<4xf32>
    %48 = vector.multi_reduction <maximumf>, %46, %cst_16 [1] : vector<4x8xf32> to vector<4xf32>
    %49 = vector.shape_cast %48 : vector<4xf32> to vector<4x1xf32>
    %cst_17 = arith.constant dense<0xFF800000> : vector<1xf32>
    %50 = vector.multi_reduction <maximumf>, %49, %cst_17 [0] : vector<4x1xf32> to vector<1xf32>
    %51 = vector.shape_cast %50 : vector<1xf32> to vector<1x1xf32>
    %cst_18 = arith.constant dense<0xFF800000> : vector<4xf32>
    %52 = vector.multi_reduction <maximumf>, %47, %cst_18 [1] : vector<4x8xf32> to vector<4xf32>
    %53 = vector.shape_cast %52 : vector<4xf32> to vector<4x1xf32>
    %cst_19 = arith.constant dense<0xFF800000> : vector<1xf32>
    %54 = vector.multi_reduction <maximumf>, %53, %cst_19 [0] : vector<4x1xf32> to vector<1xf32>
    %55 = vector.shape_cast %54 : vector<1xf32> to vector<1x1xf32>
    %56 = vector.shape_cast %51 : vector<1x1xf32> to vector<1x1x1xf32>
    %c0_20 = arith.constant 0 : index
    %c0_21 = arith.constant 0 : index
    %c0_22 = arith.constant 0 : index
    %57 = vector.load %arg4[%c0_20, %c0_21, %c0_22] : memref<1x1x1xf32, #tpu.memory_space<vmem>>, vector<1x1x1xf32>
    tpu.vector_store %arg4[%c0_20, %c0_21, %c0_22], %56 {strides = array<i32>} : memref<1x1x1xf32, #tpu.memory_space<vmem>>, vector<1x1x1xf32>,
    %58 = vector.shape_cast %55 : vector<1x1xf32> to vector<1x1x1xf32>
    %c0_23 = arith.constant 0 : index
    %c0_24 = arith.constant 0 : index
    %c0_25 = arith.constant 0 : index
    %59 = vector.load %arg5[%c0_23, %c0_24, %c0_25] : memref<1x1x1xf32, #tpu.memory_space<vmem>>, vector<1x1x1xf32>
    tpu.vector_store %arg5[%c0_23, %c0_24, %c0_25], %58 {strides = array<i32>} : memref<1x1x1xf32, #tpu.memory_space<vmem>>, vector<1x1x1xf32>,
    return
  }
  func.func @transform_0(%arg0: i32) -> (i32, i32, i32) {
    %c0_i32 = arith.constant 0 : i32
    %c0_i32_0 = arith.constant 0 : i32
    %c0_i32_1 = arith.constant 0 : i32
    return %arg0, %c0_i32, %c0_i32_0 : i32, i32, i32
  }
  func.func @transform_1(%arg0: i32) -> (i32, i32) {
    %c0_i32 = arith.constant 0 : i32
    %c0_i32_0 = arith.constant 0 : i32
    %c0_i32_1 = arith.constant 0 : i32
    return %c0_i32, %c0_i32_0 : i32, i32
  }
  func.func @transform_2(%arg0: i32) -> (i32, i32) {
    %c0_i32 = arith.constant 0 : i32
    %c0_i32_0 = arith.constant 0 : i32
    %c0_i32_1 = arith.constant 0 : i32
    return %c0_i32, %c0_i32_0 : i32, i32
  }
  func.func @transform_3(%arg0: i32) -> (i32, i32, i32) {
    %c0_i32 = arith.constant 0 : i32
    %c0_i32_0 = arith.constant 0 : i32
    %c0_i32_1 = arith.constant 0 : i32
    return %arg0, %c0_i32, %c0_i32_0 : i32, i32, i32
  }
  func.func @transform_4(%arg0: i32) -> (i32, i32, i32) {
    %c0_i32 = arith.constant 0 : i32
    %c0_i32_0 = arith.constant 0 : i32
    %c0_i32_1 = arith.constant 0 : i32
    return %arg0, %c0_i32, %c0_i32_0 : i32, i32, i32
  }
}

</mosaic_0001>

<llo_original>
// kernel: tpu_custom_call.1
$region0: #{tpu_custom_call.1}
  #allocation0 [shape = 'u32[]', space=smem, size = 0x4, offset = 0x4, fixed_abs, tag = 'smem constant byte address 0x4 - core index']
  #allocation1 [shape = 'u32[144,128]{1,0:T(1,128)}', space=vmem, size = 0x12000, scoped, tag = 'internal scratch']
  %s0 = inlined_call_operand.hbm [shape: f32[2,16,64], index: 0, kind: input, shape index: {}]
  %s1 = inlined_call_operand.hbm [shape: bf16[64,64], index: 1, kind: input, shape index: {}]
  %s2 = inlined_call_operand.hbm [shape: bf16[64,64], index: 2, kind: input, shape index: {}]
  %s3 = inlined_call_operand.vmem [shape: f32[2,1,1], index: 3, kind: output, shape index: {0}]
  %s4 = inlined_call_operand.vmem [shape: f32[2,1,1], index: 4, kind: output, shape index: {1}]
  %5 = xla_tuple %s3, %s4
  %s6 = sld [smem:[#allocation0]]
  $region65: #{tpu_custom_call.1} parent=0
    _
  %s8 = ssub.s32 1, %s6
  %s9 = scalar_select 0, %s8, %s6
  $region1: #{tpu_custom_call.1} parent=0
    #allocation2 [shape = 'u8[16384]{0}', space=vmem, size = 0x4000, scoped, tag = 'input window, operand 0']
    #allocation3 [shape = 's32[2]{0}', space=sflag, size = 0x8, scoped, tag = 'scoped memory for tpu_custom_call.1']
    #allocation4 [shape = 'u8[16384]{0}', space=vmem, size = 0x4000, scoped, tag = 'input window, operand 1, single buffered']
    #allocation5 [shape = 's32[1]{0}', space=sflag, size = 0x4, scoped, tag = 'scoped memory for tpu_custom_call.1']
    #allocation6 [shape = 'u8[16384]{0}', space=vmem, size = 0x4000, scoped, tag = 'input window, operand 2, single buffered']
    %10 = vsyncpa [#allocation3], 0
    %s11 = scalar_lea.sflag [#allocation3], 1
    %12 = vsyncpa %s11, 0
    %13 = vsyncpa [#allocation5], 0
    loop: start=0, step=1, limit=4
    $region2: #{tpu_custom_call.1} parent=1 // loop_pre_header
      _
    $region3: #{tpu_custom_call.1} parent=1 // loop_header
      %s15 = sphi 0, %s19
      %p16 = scmp.ge.s32.totalorder %s15, 4
      %s25 = sphi 0, %s27
      %s28 = sphi 0, %s25
      %s29 = sphi 0, %s28
      %s45 = sphi 0, %s29
      %s49 = sphi 0, %s49
      %s51 = sphi 0, %s49
      %s52 = sphi 0, %s51
      %s66 = sphi 0, %s52
      %s70 = sphi 0, %s70
      %s72 = sphi 0, %s70
      %s73 = sphi 0, %s72
      %s87 = sphi 0, %s73
      %s93 = sphi 0, %s95
      %s96 = sphi 0, %s93
      %s97 = sphi 0, %s96
      %s113 = sphi 0, %s97
      %s119 = sphi 0, %s121
      %s122 = sphi 0, %s119
      %s123 = sphi 0, %s122
      %s139 = sphi 0, %s123
    $region4: #{tpu_custom_call.1} parent=1 // loop_header_branch
      %18 = sbr.rel (%p16) target = $region8
    $region5: #{tpu_custom_call.1} parent=1 // loop_body
      %s20 = ssub.s32 %s15, 1
      %s21 = ssub.s32 %s15, 2
      %s22 = sadd.s32 %s15, 1
      %s23 = ssub.s32 %s15, %s22
      %p24 = scmp.eq.s32.totalorder %s23, 0
      %s26 = sadd.s32 %s25, 1
      %s27 = scalar_select %p24, %s25, %s26
      %p30 = pneg %p24
      %p31 = scmp.eq.s32.totalorder %s15, 1
      %p32 = por %p30, %p31
      %p33 = scmp.ne.s32.totalorder %s25, %s28
      %p34 = scmp.eq.s32.totalorder %s15, 0
      %p35 = por %p33, %p34
      %p36 = scmp.ne.s32.totalorder %s25, %s28
      %p37 = scmp.eq.s32.totalorder %s20, 1
      %p38 = por %p36, %p37
      %p39 = scmp.ne.s32.totalorder %s28, %s29
      %p40 = scmp.eq.s32.totalorder %s20, 0
      %p41 = por %p39, %p40
      %p42 = scmp.ne.s32.totalorder %s28, %s29
      %p43 = scmp.eq.s32.totalorder %s21, 1
      %p44 = por %p42, %p43
      %p46 = scmp.ne.s32.totalorder %s29, %s45
      %p47 = scmp.eq.s32.totalorder %s21, 0
      %p48 = por %p46, %p47
      %s50 = sadd.s32 %s49, 1
      %p53 = scmp.eq.s32.totalorder %s15, 1
      %p54 = scmp.ne.s32.totalorder %s49, %s51
      %p55 = scmp.eq.s32.totalorder %s15, 0
      %p56 = por %p54, %p55
      %p57 = scmp.ne.s32.totalorder %s49, %s51
      %p58 = scmp.eq.s32.totalorder %s20, 1
      %p59 = por %p57, %p58
      %p60 = scmp.ne.s32.totalorder %s51, %s52
      %p61 = scmp.eq.s32.totalorder %s20, 0
      %p62 = por %p60, %p61
      %p63 = scmp.ne.s32.totalorder %s51, %s52
      %p64 = scmp.eq.s32.totalorder %s21, 1
      %p65 = por %p63, %p64
      %p67 = scmp.ne.s32.totalorder %s52, %s66
      %p68 = scmp.eq.s32.totalorder %s21, 0
      %p69 = por %p67, %p68
      %s71 = sadd.s32 %s70, 1
      %p74 = scmp.eq.s32.totalorder %s15, 1
      %p75 = scmp.ne.s32.totalorder %s70, %s72
      %p76 = scmp.eq.s32.totalorder %s15, 0
      %p77 = por %p75, %p76
      %p78 = scmp.ne.s32.totalorder %s70, %s72
      %p79 = scmp.eq.s32.totalorder %s20, 1
      %p80 = por %p78, %p79
      %p81 = scmp.ne.s32.totalorder %s72, %s73
      %p82 = scmp.eq.s32.totalorder %s20, 0
      %p83 = por %p81, %p82
      %p84 = scmp.ne.s32.totalorder %s72, %s73
      %p85 = scmp.eq.s32.totalorder %s21, 1
      %p86 = por %p84, %p85
      %p88 = scmp.ne.s32.totalorder %s73, %s87
      %p89 = scmp.eq.s32.totalorder %s21, 0
      %p90 = por %p88, %p89
      %s91 = ssub.s32 %s15, %s22
      %p92 = scmp.eq.s32.totalorder %s91, 0
      %s94 = sadd.s32 %s93, 1
      %s95 = scalar_select %p92, %s93, %s94
      %p98 = pneg %p92
      %p99 = scmp.eq.s32.totalorder %s15, 1
      %p100 = por %p98, %p99
      %p101 = scmp.ne.s32.totalorder %s93, %s96
      %p102 = scmp.eq.s32.totalorder %s15, 0
      %p103 = por %p101, %p102
      %p104 = scmp.ne.s32.totalorder %s93, %s96
      %p105 = scmp.eq.s32.totalorder %s20, 1
      %p106 = por %p104, %p105
      %p107 = scmp.ne.s32.totalorder %s96, %s97
      %p108 = scmp.eq.s32.totalorder %s20, 0
      %p109 = por %p107, %p108
      %p110 = scmp.ne.s32.totalorder %s96, %s97
      %p111 = scmp.eq.s32.totalorder %s21, 1
      %p112 = por %p110, %p111
      %p114 = scmp.ne.s32.totalorder %s97, %s113
      %p115 = scmp.eq.s32.totalorder %s21, 0
      %p116 = por %p114, %p115
      %s117 = ssub.s32 %s15, %s22
      %p118 = scmp.eq.s32.totalorder %s117, 0
      %s120 = sadd.s32 %s119, 1
      %s121 = scalar_select %p118, %s119, %s120
      %p124 = pneg %p118
      %p125 = scmp.eq.s32.totalorder %s15, 1
      %p126 = por %p124, %p125
      %p127 = scmp.ne.s32.totalorder %s119, %s122
      %p128 = scmp.eq.s32.totalorder %s15, 0
      %p129 = por %p127, %p128
      %p130 = scmp.ne.s32.totalorder %s119, %s122
      %p131 = scmp.eq.s32.totalorder %s20, 1
      %p132 = por %p130, %p131
      %p133 = scmp.ne.s32.totalorder %s122, %s123
      %p134 = scmp.eq.s32.totalorder %s20, 0
      %p135 = por %p133, %p134
      %p136 = scmp.ne.s32.totalorder %s122, %s123
      %p137 = scmp.eq.s32.totalorder %s21, 1
      %p138 = por %p136, %p137
      %p140 = scmp.ne.s32.totalorder %s123, %s139
      %p141 = scmp.eq.s32.totalorder %s21, 0
      %p142 = por %p140, %p141
      %p143 = scmp.le.s32.totalorder 1, %s15
      %p144 = scmp.lt.s32.totalorder %s15, 3
      %p145 = pnand %p143, %p144
      %p146 = pneg %p145
      // Predicated region
      $region9: #{tpu_custom_call.1} parent=5 // pred_check
        _
      $region10: #{tpu_custom_call.1} parent=5 // pred_check_branch
        %148 = sbr.rel (%p145) target = $region12
      $region11: #{tpu_custom_call.1} parent=5 // pred_region
        %s149 = ssub.s32 %s15, 1
        // Predicated region
        $region13: #{tpu_custom_call.1} parent=11 // pred_check
          %p150 = pneg %p62
        $region14: #{tpu_custom_call.1} parent=11 // pred_check_branch
          %152 = sbr.rel (%p150) target = $region16
        $region15: #{tpu_custom_call.1} parent=11 // pred_region
          %s154 = ssub.s32 512, 512
          %155 = vsyncadd [#allocation5], %s154
          %s156 = sshll.u32 [#allocation4], 4
          %s157 = int_to_ptr.vmem [resolvable:$true] %s156
          %162 = dma.hbm_to_vmem [thread:$0]  %s1, 512, %s157, [#allocation5], 64, 64, 4
        $region16: #{tpu_custom_call.1} parent=11 // pred_fallthru
          _
        // Predicated region
        $region17: #{tpu_custom_call.1} parent=11 // pred_check
          %p163 = pneg %p83
        $region18: #{tpu_custom_call.1} parent=11 // pred_check_branch
          %165 = sbr.rel (%p163) target = $region20
        $region19: #{tpu_custom_call.1} parent=11 // pred_region
          %s167 = ssub.s32 512, 512
          %168 = vsyncadd [#allocation5], %s167
          %s169 = sshll.u32 [#allocation6], 4
          %s170 = int_to_ptr.vmem [resolvable:$true] %s169
          %175 = dma.hbm_to_vmem [thread:$0]  %s2, 512, %s170, [#allocation5], 64, 64, 4
        $region20: #{tpu_custom_call.1} parent=11 // pred_fallthru
          _
      $region12: #{tpu_custom_call.1} parent=5 // pred_fallthru
        _
      %p176 = scmp.lt.s32.totalorder %s15, 2
      // Predicated region
      $region21: #{tpu_custom_call.1} parent=5 // pred_check
        %p177 = pneg %p176
      $region22: #{tpu_custom_call.1} parent=5 // pred_check_branch
        %179 = sbr.rel (%p177) target = $region24
      $region23: #{tpu_custom_call.1} parent=5 // pred_region
        // Predicated region
        $region25: #{tpu_custom_call.1} parent=23 // pred_check
          %p180 = pneg %p35
        $region26: #{tpu_custom_call.1} parent=23 // pred_check_branch
          %182 = sbr.rel (%p180) target = $region28
        $region27: #{tpu_custom_call.1} parent=23 // pred_region
          %s183 = sand.u32 %s25, 1
          %s184 = scalar_lea.sflag [#allocation3], %s183
          %s185 = sand.u32 %s25, 1
          %s186 = smul.addr %s185, 16
          %s187 = scalar_lea.vmem [#allocation2], %s186
          %s189 = ssub.s32 256, 256
          %190 = vsyncadd %s184, %s189
          %s191 = smul.addr %s15, 2
          %s192 = smul.addr %s191, 128
          %s193 = scalar_lea.hbm %s0, %s192
          %s194 = sshll.u32 %s187, 4
          %s195 = int_to_ptr.vmem [resolvable:$true] %s194
          %200 = dma.hbm_to_vmem [thread:$0]  %s193, 256, %s195, %s184, 128, 128, 8
        $region28: #{tpu_custom_call.1} parent=23 // pred_fallthru
          _
      $region24: #{tpu_custom_call.1} parent=5 // pred_fallthru
        _
      %p201 = scmp.le.s32.totalorder 1, %s15
      %p202 = scmp.lt.s32.totalorder %s15, 3
      %p203 = pnand %p201, %p202
      %p204 = pneg %p203
      // Predicated region
      $region29: #{tpu_custom_call.1} parent=5 // pred_check
        _
      $region30: #{tpu_custom_call.1} parent=5 // pred_check_branch
        %206 = sbr.rel (%p203) target = $region32
      $region31: #{tpu_custom_call.1} parent=5 // pred_region
        %s207 = ssub.s32 %s15, 1
        %s208 = sand.u32 %s28, 1
        %s209 = scalar_lea.sflag [#allocation3], %s208
        %s210 = sand.u32 %s28, 1
        %s211 = smul.addr %s210, 16
        %s212 = scalar_lea.vmem [#allocation2], %s211
        // Predicated region
        $region33: #{tpu_custom_call.1} parent=31 // pred_check
          %p213 = pneg %p41
        $region34: #{tpu_custom_call.1} parent=31 // pred_check_branch
          %215 = sbr.rel (%p213) target = $region36
        $region35: #{tpu_custom_call.1} parent=31 // pred_region
          %216 = dma.done %s209, 256
        $region36: #{tpu_custom_call.1} parent=31 // pred_fallthru
          _
        // Predicated region
        $region37: #{tpu_custom_call.1} parent=31 // pred_check
          %p217 = pneg %p62
        $region38: #{tpu_custom_call.1} parent=31 // pred_check_branch
          %219 = sbr.rel (%p217) target = $region40
        $region39: #{tpu_custom_call.1} parent=31 // pred_region
          %220 = dma.done [#allocation5], 512
        $region40: #{tpu_custom_call.1} parent=31 // pred_fallthru
          _
        // Predicated region
        $region41: #{tpu_custom_call.1} parent=31 // pred_check
          %p221 = pneg %p83
        $region42: #{tpu_custom_call.1} parent=31 // pred_check_branch
          %223 = sbr.rel (%p221) target = $region44
        $region43: #{tpu_custom_call.1} parent=31 // pred_region
          %224 = dma.done [#allocation5], 512
        $region44: #{tpu_custom_call.1} parent=31 // pred_fallthru
          _
        %s225 = sand.u32 %s28, 1
        %s226 = scalar_lea.sflag [#allocation3], %s225
        %s227 = sand.u32 %s28, 1
        %s228 = smul.addr %s227, 16
        %s229 = scalar_lea.vmem [#allocation2], %s228
        %p230 = pneg %p41
        %p231 = pneg %p38
        %p232 = pneg %p62
        %p233 = pneg %p59
        %p234 = pneg %p83
        %p235 = pneg %p80
        %p236 = pneg %p109
        %p237 = pneg %p106
        %p238 = scmp.lt.s32.totalorder %s20, 1
        %s239 = scalar_select %p238, %s20, 1
        %s240 = scalar_lea.vmem %s3, %s239
        %p241 = pneg %p135
        %p242 = pneg %p132
        %p243 = scmp.lt.s32.totalorder %s20, 1
        %s244 = scalar_select %p243, %s20, 1
        %s245 = scalar_lea.vmem %s4, %s244
        %p246 = scmp.lt.s32.totalorder %s20, 1
        %s247 = scalar_select %p246, %s20, 1
        %s248 = scalar_lea.vmem %s3, %s247
        %p249 = scmp.lt.s32.totalorder %s20, 1
        %s250 = scalar_select %p249, %s20, 1
        %s251 = scalar_lea.vmem %s4, %s250
        %v253 = vld [vmem:[%s212] sm:$0xff]
        %v254 = vld [vmem:[%s212 + $0x8] sm:$0xff]
        %v255 = vpack.c.bf16 %v254, %v253
        %v256 = vld [vmem:[#allocation4] sm:$0xf]
        %v257 = vld [vmem:[#allocation4 + $0x4] sm:$0xf]
        %v258 = vld [vmem:[#allocation4 + $0x8] sm:$0xf]
        %v259 = vld [vmem:[#allocation4 + $0xc] sm:$0xf]
        %v260 = vld [vmem:[#allocation4 + $0x10] sm:$0xf]
        %v261 = vld [vmem:[#allocation4 + $0x14] sm:$0xf]
        %v262 = vld [vmem:[#allocation4 + $0x18] sm:$0xf]
        %v263 = vld [vmem:[#allocation4 + $0x1c] sm:$0xf]
        %v272 = vunpack.c.l.b16 %v256
        %v273 = vunpack.c.l.b16 %v257
        %v274 = vunpack.c.l.b16 %v258
        %v275 = vunpack.c.l.b16 %v259
        %v276 = vunpack.c.l.b16 %v260
        %v277 = vunpack.c.l.b16 %v261
        %v278 = vunpack.c.l.b16 %v262
        %v279 = vunpack.c.l.b16 %v263
        %v280 = vpack.c.b16 %v273, %v272
        %v281 = vpack.c.b16 %v275, %v274
        %v282 = vpack.c.b16 %v277, %v276
        %v283 = vpack.c.b16 %v279, %v278
        %vm288 = vcmask 523264
        %v290 = vsel %vm288, %v255, 0
        %292 = vmatprep.subr.bf16.mxu0 0
        %293 = vmatpush1.bf16.msra.mxu0 %v280
        %294 = vmatprep.subr.bf16.mxu0 0
        %295 = vmatpush1.bf16.msra.mxu0 %v281
        %296 = vmatprep.subr.bf16.mxu0 0
        %297 = vmatpush1.bf16.msra.mxu0 %v282
        %298 = vmatprep.subr.bf16.mxu0 0
        %299 = vmatpush1.bf16.msra.mxu0 %v283
        %300 = vmatprep.subr.bf16.mxu0 0
        %301 = vmatpush1.bf16.msra.mxu0 0
        %302 = vmatprep.subr.bf16.mxu0 0
        %303 = vmatpush1.bf16.msra.mxu0 0
        %304 = vmatprep.subr.bf16.mxu0 0
        %305 = vmatpush1.bf16.msra.mxu0 0
        %306 = vmatprep.subr.bf16.mxu0 0
        %307 = vmatpush1.bf16.msra.mxu0 0
        %308 = vmatprep.subr.bf16.mxu0 0
        %309 = vmatpush1.bf16.msra.mxu0 0
        %310 = vmatprep.subr.bf16.mxu0 0
        %311 = vmatpush1.bf16.msra.mxu0 0
        %312 = vmatprep.subr.bf16.mxu0 0
        %313 = vmatpush1.bf16.msra.mxu0 0
        %314 = vmatprep.subr.bf16.mxu0 0
        %315 = vmatpush1.bf16.msra.mxu0 0
        %316 = vmatprep.subr.bf16.mxu0 0
        %317 = vmatpush1.bf16.msra.mxu0 0
        %318 = vmatprep.subr.bf16.mxu0 0
        %319 = vmatpush1.bf16.msra.mxu0 0
        %320 = vmatprep.subr.bf16.mxu0 0
        %321 = vmatpush1.bf16.msra.mxu0 0
        %322 = vmatprep.subr.bf16.mxu0 0
        %323 = vmatpush1.bf16.msra.mxu0 0
        %324 = vmatprep.mubr.bf16.mxu0 0
        %325 = vmatmul.mubr.bf16.gmra.mrb[0].mxu0 %v290
        %v326 = vpop.f32.mrb[0].mxu0
        %v327 = vadd.f32 0.0, %v326
        %v328 = vpop.f32.mrb[0].mxu0
        %v329 = vpop.f32.mrb[0].mxu0
        %v330 = vadd.f32 0.0, %v329
        %v331 = vpop.f32.mrb[0].mxu0
        %332 = vdwg.mxu0
        %v333 = vld [vmem:[#allocation6] sm:$0xf]
        %v334 = vld [vmem:[#allocation6 + $0x4] sm:$0xf]
        %v335 = vld [vmem:[#allocation6 + $0x8] sm:$0xf]
        %v336 = vld [vmem:[#allocation6 + $0xc] sm:$0xf]
        %v337 = vld [vmem:[#allocation6 + $0x10] sm:$0xf]
        %v338 = vld [vmem:[#allocation6 + $0x14] sm:$0xf]
        %v339 = vld [vmem:[#allocation6 + $0x18] sm:$0xf]
        %v340 = vld [vmem:[#allocation6 + $0x1c] sm:$0xf]
        %v349 = vunpack.c.l.b16 %v333
        %v350 = vunpack.c.l.b16 %v334
        %v351 = vunpack.c.l.b16 %v335
        %v352 = vunpack.c.l.b16 %v336
        %v353 = vunpack.c.l.b16 %v337
        %v354 = vunpack.c.l.b16 %v338
        %v355 = vunpack.c.l.b16 %v339
        %v356 = vunpack.c.l.b16 %v340
        %v357 = vpack.c.b16 %v350, %v349
        %v358 = vpack.c.b16 %v352, %v351
        %v359 = vpack.c.b16 %v354, %v353
        %v360 = vpack.c.b16 %v356, %v355
        %365 = vmatprep.subr.bf16.mxu0 0
        %366 = vmatpush1.bf16.msra.mxu0 %v357
        %367 = vmatprep.subr.bf16.mxu0 0
        %368 = vmatpush1.bf16.msra.mxu0 %v358
        %369 = vmatprep.subr.bf16.mxu0 0
        %370 = vmatpush1.bf16.msra.mxu0 %v359
        %371 = vmatprep.subr.bf16.mxu0 0
        %372 = vmatpush1.bf16.msra.mxu0 %v360
        %373 = vmatprep.subr.bf16.mxu0 0
        %374 = vmatpush1.bf16.msra.mxu0 0
        %375 = vmatprep.subr.bf16.mxu0 0
        %376 = vmatpush1.bf16.msra.mxu0 0
        %377 = vmatprep.subr.bf16.mxu0 0
        %378 = vmatpush1.bf16.msra.mxu0 0
        %379 = vmatprep.subr.bf16.mxu0 0
        %380 = vmatpush1.bf16.msra.mxu0 0
        %381 = vmatprep.subr.bf16.mxu0 0
        %382 = vmatpush1.bf16.msra.mxu0 0
        %383 = vmatprep.subr.bf16.mxu0 0
        %384 = vmatpush1.bf16.msra.mxu0 0
        %385 = vmatprep.subr.bf16.mxu0 0
        %386 = vmatpush1.bf16.msra.mxu0 0
        %387 = vmatprep.subr.bf16.mxu0 0
        %388 = vmatpush1.bf16.msra.mxu0 0
        %389 = vmatprep.subr.bf16.mxu0 0
        %390 = vmatpush1.bf16.msra.mxu0 0
        %391 = vmatprep.subr.bf16.mxu0 0
        %392 = vmatpush1.bf16.msra.mxu0 0
        %393 = vmatprep.subr.bf16.mxu0 0
        %394 = vmatpush1.bf16.msra.mxu0 0
        %395 = vmatprep.subr.bf16.mxu0 0
        %396 = vmatpush1.bf16.msra.mxu0 0
        %397 = vmatprep.mubr.bf16.mxu0 0
        %398 = vmatmul.mubr.bf16.gmra.mrb[0].mxu0 %v290
        %v399 = vpop.f32.mrb[0].mxu0
        %v400 = vadd.f32 0.0, %v399
        %v401 = vpop.f32.mrb[0].mxu0
        %v402 = vpop.f32.mrb[0].mxu0
        %v403 = vadd.f32 0.0, %v402
        %v404 = vpop.f32.mrb[0].mxu0
        %405 = vdwg.mxu0
        %v408 = vcombine.high %v327, %v327
        %v410 = vunpack.c.l.s4 1983009808
        %v411 = vunpack.c.0.s8 %v410
        %v412 = vlaneseq
        %v413 = vshrl.u32 %v412, 7
        %v414 = vsub.s32 %v411, %v413
        %v415 = vrot.slane %v327, %v414
        %v417 = vunpack.c.l.s4 1983009808
        %v418 = vunpack.c.0.s8 %v417
        %v419 = vlaneseq
        %v420 = vshrl.u32 %v419, 7
        %v421 = vsub.s32 %v418, %v420
        %v422 = vrot.slane %v408, %v421
        %v423 = vcombine.high %v415, %v415
        %v424 = vcombine.high %v422, %v422
        %v425 = vcombine.high %v330, %v330
        %v427 = vunpack.c.l.s4 1983009808
        %v428 = vunpack.c.0.s8 %v427
        %v429 = vlaneseq
        %v430 = vshrl.u32 %v429, 7
        %v431 = vsub.s32 %v428, %v430
        %v432 = vrot.slane %v330, %v431
        %v434 = vunpack.c.l.s4 1983009808
        %v435 = vunpack.c.0.s8 %v434
        %v436 = vlaneseq
        %v437 = vshrl.u32 %v436, 7
        %v438 = vsub.s32 %v435, %v437
        %v439 = vrot.slane %v425, %v438
        %v440 = vcombine.high %v432, %v432
        %v441 = vcombine.high %v439, %v439
        %vm450 = vcmask 517120
        %v451 = vsel %vm450, %v415, 0.0
        %v452 = vrot.slane %v451, 4
        %v453 = vadd.f32 %v451, %v452
        %v454 = vrot.slane %v453, 2
        %v455 = vadd.f32 %v453, %v454
        %v456 = vrot.slane %v455, 1
        %v457 = vadd.f32 %v455, %v456
        %v458 = vsel %vm450, %v423, 0.0
        %v459 = vrot.slane %v458, 4
        %v460 = vadd.f32 %v458, %v459
        %v461 = vrot.slane %v460, 2
        %v462 = vadd.f32 %v460, %v461
        %v463 = vrot.slane %v462, 1
        %v464 = vadd.f32 %v462, %v463
        %v465 = vsel %vm450, %v422, 0.0
        %v466 = vrot.slane %v465, 4
        %v467 = vadd.f32 %v465, %v466
        %v468 = vrot.slane %v467, 2
        %v469 = vadd.f32 %v467, %v468
        %v470 = vrot.slane %v469, 1
        %v471 = vadd.f32 %v469, %v470
        %v472 = vsel %vm450, %v424, 0.0
        %v473 = vrot.slane %v472, 4
        %v474 = vadd.f32 %v472, %v473
        %v475 = vrot.slane %v474, 2
        %v476 = vadd.f32 %v474, %v475
        %v477 = vrot.slane %v476, 1
        %v478 = vadd.f32 %v476, %v477
        %v479 = vsel %vm450, %v432, 0.0
        %v480 = vrot.slane %v479, 4
        %v481 = vadd.f32 %v479, %v480
        %v482 = vrot.slane %v481, 2
        %v483 = vadd.f32 %v481, %v482
        %v484 = vrot.slane %v483, 1
        %v485 = vadd.f32 %v483, %v484
        %v486 = vsel %vm450, %v440, 0.0
        %v487 = vrot.slane %v486, 4
        %v488 = vadd.f32 %v486, %v487
        %v489 = vrot.slane %v488, 2
        %v490 = vadd.f32 %v488, %v489
        %v491 = vrot.slane %v490, 1
        %v492 = vadd.f32 %v490, %v491
        %v493 = vsel %vm450, %v439, 0.0
        %v494 = vrot.slane %v493, 4
        %v495 = vadd.f32 %v493, %v494
        %v496 = vrot.slane %v495, 2
        %v497 = vadd.f32 %v495, %v496
        %v498 = vrot.slane %v497, 1
        %v499 = vadd.f32 %v497, %v498
        %v500 = vsel %vm450, %v441, 0.0
        %v501 = vrot.slane %v500, 4
        %v502 = vadd.f32 %v500, %v501
        %v503 = vrot.slane %v502, 2
        %v504 = vadd.f32 %v502, %v503
        %v505 = vrot.slane %v504, 1
        %v506 = vadd.f32 %v504, %v505
        %v507 = vrcp.pop 2.0
        %v508 = vmul.f32 %v457, %v507
        %v509 = vmul.f32 %v464, %v507
        %v510 = vmul.f32 %v471, %v507
        %v511 = vmul.f32 %v478, %v507
        %v512 = vmul.f32 %v485, %v507
        %v513 = vmul.f32 %v492, %v507
        %v514 = vmul.f32 %v499, %v507
        %v515 = vmul.f32 %v506, %v507
        %524 = vrot.lane.b32.xlu0 %v508, 112
        %v525 = vpop.permute.xlu0 %524
        %526 = vrot.lane.b32.xlu0 %v509, 112
        %v527 = vpop.permute.xlu0 %526
        %528 = vrot.lane.b32.xlu0 %v510, 112
        %v529 = vpop.permute.xlu0 %528
        %530 = vrot.lane.b32.xlu0 %v511, 112
        %v531 = vpop.permute.xlu0 %530
        %532 = vrot.lane.b32.xlu0 %v512, 112
        %v533 = vpop.permute.xlu0 %532
        %534 = vrot.lane.b32.xlu0 %v513, 112
        %v535 = vpop.permute.xlu0 %534
        %536 = vrot.lane.b32.xlu0 %v514, 112
        %v537 = vpop.permute.xlu0 %536
        %538 = vrot.lane.b32.xlu0 %v515, 112
        %v539 = vpop.permute.xlu0 %538
        %548 = vrot.lane.b32.xlu0 %v508, 96
        %v549 = vpop.permute.xlu0 %548
        %550 = vrot.lane.b32.xlu0 %v509, 96
        %v551 = vpop.permute.xlu0 %550
        %552 = vrot.lane.b32.xlu0 %v510, 96
        %v553 = vpop.permute.xlu0 %552
        %554 = vrot.lane.b32.xlu0 %v511, 96
        %v555 = vpop.permute.xlu0 %554
        %556 = vrot.lane.b32.xlu0 %v512, 96
        %v557 = vpop.permute.xlu0 %556
        %558 = vrot.lane.b32.xlu0 %v513, 96
        %v559 = vpop.permute.xlu0 %558
        %560 = vrot.lane.b32.xlu0 %v514, 96
        %v561 = vpop.permute.xlu0 %560
        %562 = vrot.lane.b32.xlu0 %v515, 96
        %v563 = vpop.permute.xlu0 %562
        %572 = vrot.lane.b32.xlu0 %v508, 80
        %v573 = vpop.permute.xlu0 %572
        %574 = vrot.lane.b32.xlu0 %v509, 80
        %v575 = vpop.permute.xlu0 %574
        %576 = vrot.lane.b32.xlu0 %v510, 80
        %v577 = vpop.permute.xlu0 %576
        %578 = vrot.lane.b32.xlu0 %v511, 80
        %v579 = vpop.permute.xlu0 %578
        %580 = vrot.lane.b32.xlu0 %v512, 80
        %v581 = vpop.permute.xlu0 %580
        %582 = vrot.lane.b32.xlu0 %v513, 80
        %v583 = vpop.permute.xlu0 %582
        %584 = vrot.lane.b32.xlu0 %v514, 80
        %v585 = vpop.permute.xlu0 %584
        %586 = vrot.lane.b32.xlu0 %v515, 80
        %v587 = vpop.permute.xlu0 %586
        %v596 = vpack.c.bf16 %v508, %v508
        %v597 = vpack.c.bf16 %v509, %v509
        %v598 = vpack.c.bf16 %v510, %v510
        %v599 = vpack.c.bf16 %v511, %v511
        %v600 = vpack.c.bf16 %v512, %v512
        %v601 = vpack.c.bf16 %v513, %v513
        %v602 = vpack.c.bf16 %v514, %v514
        %v603 = vpack.c.bf16 %v515, %v515
        %v604 = vpack.c.bf16 %v525, %v525
        %v605 = vpack.c.bf16 %v527, %v527
        %v606 = vpack.c.bf16 %v529, %v529
        %v607 = vpack.c.bf16 %v531, %v531
        %v608 = vpack.c.bf16 %v533, %v533
        %v609 = vpack.c.bf16 %v535, %v535
        %v610 = vpack.c.bf16 %v537, %v537
        %v611 = vpack.c.bf16 %v539, %v539
        %v612 = vpack.c.bf16 %v549, %v549
        %v613 = vpack.c.bf16 %v551, %v551
        %v614 = vpack.c.bf16 %v553, %v553
        %v615 = vpack.c.bf16 %v555, %v555
        %v616 = vpack.c.bf16 %v557, %v557
        %v617 = vpack.c.bf16 %v559, %v559
        %v618 = vpack.c.bf16 %v561, %v561
        %v619 = vpack.c.bf16 %v563, %v563
        %v620 = vpack.c.bf16 %v573, %v573
        %v621 = vpack.c.bf16 %v575, %v575
        %v622 = vpack.c.bf16 %v577, %v577
        %v623 = vpack.c.bf16 %v579, %v579
        %v624 = vpack.c.bf16 %v581, %v581
        %v625 = vpack.c.bf16 %v583, %v583
        %v626 = vpack.c.bf16 %v585, %v585
        %v627 = vpack.c.bf16 %v587, %v587
        %v630 = vcombine.high %v400, %v400
        %v632 = vunpack.c.l.s4 1983009808
        %v633 = vunpack.c.0.s8 %v632
        %v634 = vlaneseq
        %v635 = vshrl.u32 %v634, 7
        %v636 = vsub.s32 %v633, %v635
        %v637 = vrot.slane %v400, %v636
        %v639 = vunpack.c.l.s4 1983009808
        %v640 = vunpack.c.0.s8 %v639
        %v641 = vlaneseq
        %v642 = vshrl.u32 %v641, 7
        %v643 = vsub.s32 %v640, %v642
        %v644 = vrot.slane %v630, %v643
        %v645 = vcombine.high %v637, %v637
        %v646 = vcombine.high %v644, %v644
        %v647 = vcombine.high %v403, %v403
        %v649 = vunpack.c.l.s4 1983009808
        %v650 = vunpack.c.0.s8 %v649
        %v651 = vlaneseq
        %v652 = vshrl.u32 %v651, 7
        %v653 = vsub.s32 %v650, %v652
        %v654 = vrot.slane %v403, %v653
        %v656 = vunpack.c.l.s4 1983009808
        %v657 = vunpack.c.0.s8 %v656
        %v658 = vlaneseq
        %v659 = vshrl.u32 %v658, 7
        %v660 = vsub.s32 %v657, %v659
        %v661 = vrot.slane %v647, %v660
        %v662 = vcombine.high %v654, %v654
        %v663 = vcombine.high %v661, %v661
        %v672 = vsel %vm450, %v637, 0.0
        %v673 = vrot.slane %v672, 4
        %v674 = vadd.f32 %v672, %v673
        %v675 = vrot.slane %v674, 2
        %v676 = vadd.f32 %v674, %v675
        %v677 = vrot.slane %v676, 1
        %v678 = vadd.f32 %v676, %v677
        %v679 = vsel %vm450, %v645, 0.0
        %v680 = vrot.slane %v679, 4
        %v681 = vadd.f32 %v679, %v680
        %v682 = vrot.slane %v681, 2
        %v683 = vadd.f32 %v681, %v682
        %v684 = vrot.slane %v683, 1
        %v685 = vadd.f32 %v683, %v684
        %v686 = vsel %vm450, %v644, 0.0
        %v687 = vrot.slane %v686, 4
        %v688 = vadd.f32 %v686, %v687
        %v689 = vrot.slane %v688, 2
        %v690 = vadd.f32 %v688, %v689
        %v691 = vrot.slane %v690, 1
        %v692 = vadd.f32 %v690, %v691
        %v693 = vsel %vm450, %v646, 0.0
        %v694 = vrot.slane %v693, 4
        %v695 = vadd.f32 %v693, %v694
        %v696 = vrot.slane %v695, 2
        %v697 = vadd.f32 %v695, %v696
        %v698 = vrot.slane %v697, 1
        %v699 = vadd.f32 %v697, %v698
        %v700 = vsel %vm450, %v654, 0.0
        %v701 = vrot.slane %v700, 4
        %v702 = vadd.f32 %v700, %v701
        %v703 = vrot.slane %v702, 2
        %v704 = vadd.f32 %v702, %v703
        %v705 = vrot.slane %v704, 1
        %v706 = vadd.f32 %v704, %v705
        %v707 = vsel %vm450, %v662, 0.0
        %v708 = vrot.slane %v707, 4
        %v709 = vadd.f32 %v707, %v708
        %v710 = vrot.slane %v709, 2
        %v711 = vadd.f32 %v709, %v710
        %v712 = vrot.slane %v711, 1
        %v713 = vadd.f32 %v711, %v712
        %v714 = vsel %vm450, %v661, 0.0
        %v715 = vrot.slane %v714, 4
        %v716 = vadd.f32 %v714, %v715
        %v717 = vrot.slane %v716, 2
        %v718 = vadd.f32 %v716, %v717
        %v719 = vrot.slane %v718, 1
        %v720 = vadd.f32 %v718, %v719
        %v721 = vsel %vm450, %v663, 0.0
        %v722 = vrot.slane %v721, 4
        %v723 = vadd.f32 %v721, %v722
        %v724 = vrot.slane %v723, 2
        %v725 = vadd.f32 %v723, %v724
        %v726 = vrot.slane %v725, 1
        %v727 = vadd.f32 %v725, %v726
        %v728 = vmul.f32 %v678, %v507
        %v729 = vmul.f32 %v685, %v507
        %v730 = vmul.f32 %v692, %v507
        %v731 = vmul.f32 %v699, %v507
        %v732 = vmul.f32 %v706, %v507
        %v733 = vmul.f32 %v713, %v507
        %v734 = vmul.f32 %v720, %v507
        %v735 = vmul.f32 %v727, %v507
        %744 = vrot.lane.b32.xlu0 %v728, 112
        %v745 = vpop.permute.xlu0 %744
        %746 = vrot.lane.b32.xlu0 %v729, 112
        %v747 = vpop.permute.xlu0 %746
        %748 = vrot.lane.b32.xlu0 %v730, 112
        %v749 = vpop.permute.xlu0 %748
        %750 = vrot.lane.b32.xlu0 %v731, 112
        %v751 = vpop.permute.xlu0 %750
        %752 = vrot.lane.b32.xlu0 %v732, 112
        %v753 = vpop.permute.xlu0 %752
        %754 = vrot.lane.b32.xlu0 %v733, 112
        %v755 = vpop.permute.xlu0 %754
        %756 = vrot.lane.b32.xlu0 %v734, 112
        %v757 = vpop.permute.xlu0 %756
        %758 = vrot.lane.b32.xlu0 %v735, 112
        %v759 = vpop.permute.xlu0 %758
        %768 = vrot.lane.b32.xlu0 %v728, 96
        %v769 = vpop.permute.xlu0 %768
        %770 = vrot.lane.b32.xlu0 %v729, 96
        %v771 = vpop.permute.xlu0 %770
        %772 = vrot.lane.b32.xlu0 %v730, 96
        %v773 = vpop.permute.xlu0 %772
        %774 = vrot.lane.b32.xlu0 %v731, 96
        %v775 = vpop.permute.xlu0 %774
        %776 = vrot.lane.b32.xlu0 %v732, 96
        %v777 = vpop.permute.xlu0 %776
        %778 = vrot.lane.b32.xlu0 %v733, 96
        %v779 = vpop.permute.xlu0 %778
        %780 = vrot.lane.b32.xlu0 %v734, 96
        %v781 = vpop.permute.xlu0 %780
        %782 = vrot.lane.b32.xlu0 %v735, 96
        %v783 = vpop.permute.xlu0 %782
        %792 = vrot.lane.b32.xlu0 %v728, 80
        %v793 = vpop.permute.xlu0 %792
        %794 = vrot.lane.b32.xlu0 %v729, 80
        %v795 = vpop.permute.xlu0 %794
        %796 = vrot.lane.b32.xlu0 %v730, 80
        %v797 = vpop.permute.xlu0 %796
        %798 = vrot.lane.b32.xlu0 %v731, 80
        %v799 = vpop.permute.xlu0 %798
        %800 = vrot.lane.b32.xlu0 %v732, 80
        %v801 = vpop.permute.xlu0 %800
        %802 = vrot.lane.b32.xlu0 %v733, 80
        %v803 = vpop.permute.xlu0 %802
        %804 = vrot.lane.b32.xlu0 %v734, 80
        %v805 = vpop.permute.xlu0 %804
        %806 = vrot.lane.b32.xlu0 %v735, 80
        %v807 = vpop.permute.xlu0 %806
        %v816 = vpack.c.bf16 %v728, %v728
        %v817 = vpack.c.bf16 %v729, %v729
        %v818 = vpack.c.bf16 %v730, %v730
        %v819 = vpack.c.bf16 %v731, %v731
        %v820 = vpack.c.bf16 %v732, %v732
        %v821 = vpack.c.bf16 %v733, %v733
        %v822 = vpack.c.bf16 %v734, %v734
        %v823 = vpack.c.bf16 %v735, %v735
        %v824 = vpack.c.bf16 %v745, %v745
        %v825 = vpack.c.bf16 %v747, %v747
        %v826 = vpack.c.bf16 %v749, %v749
        %v827 = vpack.c.bf16 %v751, %v751
        %v828 = vpack.c.bf16 %v753, %v753
        %v829 = vpack.c.bf16 %v755, %v755
        %v830 = vpack.c.bf16 %v757, %v757
        %v831 = vpack.c.bf16 %v759, %v759
        %v832 = vpack.c.bf16 %v769, %v769
        %v833 = vpack.c.bf16 %v771, %v771
        %v834 = vpack.c.bf16 %v773, %v773
        %v835 = vpack.c.bf16 %v775, %v775
        %v836 = vpack.c.bf16 %v777, %v777
        %v837 = vpack.c.bf16 %v779, %v779
        %v838 = vpack.c.bf16 %v781, %v781
        %v839 = vpack.c.bf16 %v783, %v783
        %v840 = vpack.c.bf16 %v793, %v793
        %v841 = vpack.c.bf16 %v795, %v795
        %v842 = vpack.c.bf16 %v797, %v797
        %v843 = vpack.c.bf16 %v799, %v799
        %v844 = vpack.c.bf16 %v801, %v801
        %v845 = vpack.c.bf16 %v803, %v803
        %v846 = vpack.c.bf16 %v805, %v805
        %v847 = vpack.c.bf16 %v807, %v807
        %v856 = vunpack.c.l.b16 %v596
        %v857 = vunpack.c.l.b16 %v597
        %v858 = vunpack.c.l.b16 %v598
        %v859 = vunpack.c.l.b16 %v599
        %v860 = vunpack.c.l.b16 %v600
        %v861 = vunpack.c.l.b16 %v601
        %v862 = vunpack.c.l.b16 %v602
        %v863 = vunpack.c.l.b16 %v603
        %v864 = vrot.slane %v857, 7
        %vm865 = vcmask 1041409
        %v866 = vsel %vm865, %v864, %v856
        %v867 = vrot.slane %v858, 6
        %vm868 = vcmask 1042434
        %v869 = vsel %vm868, %v867, %v866
        %v870 = vrot.slane %v859, 5
        %vm871 = vcmask 1043459
        %v872 = vsel %vm871, %v870, %v869
        %v873 = vrot.slane %v860, 4
        %vm874 = vcmask 1044484
        %v875 = vsel %vm874, %v873, %v872
        %v876 = vrot.slane %v861, 3
        %vm877 = vcmask 1045509
        %v878 = vsel %vm877, %v876, %v875
        %v879 = vrot.slane %v862, 2
        %vm880 = vcmask 1046534
        %v881 = vsel %vm880, %v879, %v878
        %v882 = vrot.slane %v863, 1
        %vm883 = vcmask 1047559
        %v884 = vsel %vm883, %v882, %v881
        %v885 = vpack.c.b16 %v884, %v884
        %v894 = vunpack.c.l.b16 %v816
        %v895 = vunpack.c.l.b16 %v817
        %v896 = vunpack.c.l.b16 %v818
        %v897 = vunpack.c.l.b16 %v819
        %v898 = vunpack.c.l.b16 %v820
        %v899 = vunpack.c.l.b16 %v821
        %v900 = vunpack.c.l.b16 %v822
        %v901 = vunpack.c.l.b16 %v823
        %v902 = vrot.slane %v895, 7
        %v903 = vsel %vm865, %v902, %v894
        %v904 = vrot.slane %v896, 6
        %v905 = vsel %vm868, %v904, %v903
        %v906 = vrot.slane %v897, 5
        %v907 = vsel %vm871, %v906, %v905
        %v908 = vrot.slane %v898, 4
        %v909 = vsel %vm874, %v908, %v907
        %v910 = vrot.slane %v899, 3
        %v911 = vsel %vm877, %v910, %v909
        %v912 = vrot.slane %v900, 2
        %v913 = vsel %vm880, %v912, %v911
        %v914 = vrot.slane %v901, 1
        %v915 = vsel %vm883, %v914, %v913
        %v916 = vpack.c.b16 %v915, %v915
        %vm917 = vcmask 130048
        %v919 = vsel %vm917, %v885, 0
        %v922 = vsel %vm917, %v916, 0
        %924 = vmatprep.subr.bf16.mxu0 0
        %925 = vmatpush1.bf16.xpose.msra.mxu0 %v922
        %926 = vmatprep.subr.bf16.mxu0 0
        %927 = vmatpush1.bf16.xpose.msra.mxu0 0
        %928 = vmatprep.subr.bf16.mxu0 0
        %929 = vmatpush1.bf16.xpose.msra.mxu0 0
        %930 = vmatprep.subr.bf16.mxu0 0
        %931 = vmatpush1.bf16.xpose.msra.mxu0 0
        %932 = vmatprep.subr.bf16.mxu0 0
        %933 = vmatpush1.bf16.xpose.msra.mxu0 0
        %934 = vmatprep.subr.bf16.mxu0 0
        %935 = vmatpush1.bf16.xpose.msra.mxu0 0
        %936 = vmatprep.subr.bf16.mxu0 0
        %937 = vmatpush1.bf16.xpose.msra.mxu0 0
        %938 = vmatprep.subr.bf16.mxu0 0
        %939 = vmatpush1.bf16.xpose.msra.mxu0 0
        %940 = vmatprep.subr.bf16.mxu0 0
        %941 = vmatpush1.bf16.xpose.msra.mxu0 0
        %942 = vmatprep.subr.bf16.mxu0 0
        %943 = vmatpush1.bf16.xpose.msra.mxu0 0
        %944 = vmatprep.subr.bf16.mxu0 0
        %945 = vmatpush1.bf16.xpose.msra.mxu0 0
        %946 = vmatprep.subr.bf16.mxu0 0
        %947 = vmatpush1.bf16.xpose.msra.mxu0 0
        %948 = vmatprep.subr.bf16.mxu0 0
        %949 = vmatpush1.bf16.xpose.msra.mxu0 0
        %950 = vmatprep.subr.bf16.mxu0 0
        %951 = vmatpush1.bf16.xpose.msra.mxu0 0
        %952 = vmatprep.subr.bf16.mxu0 0
        %953 = vmatpush1.bf16.xpose.msra.mxu0 0
        %954 = vmatprep.subr.bf16.mxu0 0
        %955 = vmatpush1.bf16.xpose.msra.mxu0 0
        %956 = vmatprep.mubr.bf16.mxu0 0
        %957 = vmatmul.mubr.bf16.gmra.mrb[0].mxu0 %v919
        %v958 = vpop.f32.mrb[0].mxu0
        %v959 = vadd.f32 0.0, %v958
        %v960 = vpop.f32.mrb[0].mxu0
        %v961 = vpop.f32.mrb[0].mxu0
        %v962 = vpop.f32.mrb[0].mxu0
        %963 = vdwg.mxu0
        %v972 = vunpack.c.l.b16 %v604
        %v973 = vunpack.c.l.b16 %v605
        %v974 = vunpack.c.l.b16 %v606
        %v975 = vunpack.c.l.b16 %v607
        %v976 = vunpack.c.l.b16 %v608
        %v977 = vunpack.c.l.b16 %v609
        %v978 = vunpack.c.l.b16 %v610
        %v979 = vunpack.c.l.b16 %v611
        %v980 = vrot.slane %v973, 7
        %v981 = vsel %vm865, %v980, %v972
        %v982 = vrot.slane %v974, 6
        %v983 = vsel %vm868, %v982, %v981
        %v984 = vrot.slane %v975, 5
        %v985 = vsel %vm871, %v984, %v983
        %v986 = vrot.slane %v976, 4
        %v987 = vsel %vm874, %v986, %v985
        %v988 = vrot.slane %v977, 3
        %v989 = vsel %vm877, %v988, %v987
        %v990 = vrot.slane %v978, 2
        %v991 = vsel %vm880, %v990, %v989
        %v992 = vrot.slane %v979, 1
        %v993 = vsel %vm883, %v992, %v991
        %v994 = vpack.c.b16 %v993, %v993
        %v1003 = vunpack.c.l.b16 %v824
        %v1004 = vunpack.c.l.b16 %v825
        %v1005 = vunpack.c.l.b16 %v826
        %v1006 = vunpack.c.l.b16 %v827
        %v1007 = vunpack.c.l.b16 %v828
        %v1008 = vunpack.c.l.b16 %v829
        %v1009 = vunpack.c.l.b16 %v830
        %v1010 = vunpack.c.l.b16 %v831
        %v1011 = vrot.slane %v1004, 7
        %v1012 = vsel %vm865, %v1011, %v1003
        %v1013 = vrot.slane %v1005, 6
        %v1014 = vsel %vm868, %v1013, %v1012
        %v1015 = vrot.slane %v1006, 5
        %v1016 = vsel %vm871, %v1015, %v1014
        %v1017 = vrot.slane %v1007, 4
        %v1018 = vsel %vm874, %v1017, %v1016
        %v1019 = vrot.slane %v1008, 3
        %v1020 = vsel %vm877, %v1019, %v1018
        %v1021 = vrot.slane %v1009, 2
        %v1022 = vsel %vm880, %v1021, %v1020
        %v1023 = vrot.slane %v1010, 1
        %v1024 = vsel %vm883, %v1023, %v1022
        %v1025 = vpack.c.b16 %v1024, %v1024
        %v1027 = vsel %vm917, %v994, 0
        %v1030 = vsel %vm917, %v1025, 0
        %1032 = vmatprep.subr.bf16.mxu0 0
        %1033 = vmatpush1.bf16.xpose.msra.mxu0 %v1030
        %1034 = vmatprep.subr.bf16.mxu0 0
        %1035 = vmatpush1.bf16.xpose.msra.mxu0 0
        %1036 = vmatprep.subr.bf16.mxu0 0
        %1037 = vmatpush1.bf16.xpose.msra.mxu0 0
        %1038 = vmatprep.subr.bf16.mxu0 0
        %1039 = vmatpush1.bf16.xpose.msra.mxu0 0
        %1040 = vmatprep.subr.bf16.mxu0 0
        %1041 = vmatpush1.bf16.xpose.msra.mxu0 0
        %1042 = vmatprep.subr.bf16.mxu0 0
        %1043 = vmatpush1.bf16.xpose.msra.mxu0 0
        %1044 = vmatprep.subr.bf16.mxu0 0
        %1045 = vmatpush1.bf16.xpose.msra.mxu0 0
        %1046 = vmatprep.subr.bf16.mxu0 0
        %1047 = vmatpush1.bf16.xpose.msra.mxu0 0
        %1048 = vmatprep.subr.bf16.mxu0 0
        %1049 = vmatpush1.bf16.xpose.msra.mxu0 0
        %1050 = vmatprep.subr.bf16.mxu0 0
        %1051 = vmatpush1.bf16.xpose.msra.mxu0 0
        %1052 = vmatprep.subr.bf16.mxu0 0
        %1053 = vmatpush1.bf16.xpose.msra.mxu0 0
        %1054 = vmatprep.subr.bf16.mxu0 0
        %1055 = vmatpush1.bf16.xpose.msra.mxu0 0
        %1056 = vmatprep.subr.bf16.mxu0 0
        %1057 = vmatpush1.bf16.xpose.msra.mxu0 0
        %1058 = vmatprep.subr.bf16.mxu0 0
        %1059 = vmatpush1.bf16.xpose.msra.mxu0 0
        %1060 = vmatprep.subr.bf16.mxu0 0
        %1061 = vmatpush1.bf16.xpose.msra.mxu0 0
        %1062 = vmatprep.subr.bf16.mxu0 0
        %1063 = vmatpush1.bf16.xpose.msra.mxu0 0
        %1064 = vmatprep.mubr.bf16.mxu0 0
        %1065 = vmatmul.mubr.bf16.gmra.mrb[0].mxu0 %v1027
        %v1066 = vpop.f32.mrb[0].mxu0
        %v1067 = vadd.f32 0.0, %v1066
        %v1068 = vpop.f32.mrb[0].mxu0
        %v1069 = vpop.f32.mrb[0].mxu0
        %v1070 = vpop.f32.mrb[0].mxu0
        %1071 = vdwg.mxu0
        %v1080 = vunpack.c.l.b16 %v612
        %v1081 = vunpack.c.l.b16 %v613
        %v1082 = vunpack.c.l.b16 %v614
        %v1083 = vunpack.c.l.b16 %v615
        %v1084 = vunpack.c.l.b16 %v616
        %v1085 = vunpack.c.l.b16 %v617
        %v1086 = vunpack.c.l.b16 %v618
        %v1087 = vunpack.c.l.b16 %v619
        %v1088 = vrot.slane %v1081, 7
        %v1089 = vsel %vm865, %v1088, %v1080
        %v1090 = vrot.slane %v1082, 6
        %v1091 = vsel %vm868, %v1090, %v1089
        %v1092 = vrot.slane %v1083, 5
        %v1093 = vsel %vm871, %v1092, %v1091
        %v1094 = vrot.slane %v1084, 4
        %v1095 = vsel %vm874, %v1094, %v1093
        %v1096 = vrot.slane %v1085, 3
        %v1097 = vsel %vm877, %v1096, %v1095
        %v1098 = vrot.slane %v1086, 2
        %v1099 = vsel %vm880, %v1098, %v1097
        %v1100 = vrot.slane %v1087, 1
        %v1101 = vsel %vm883, %v1100, %v1099
        %v1102 = vpack.c.b16 %v1101, %v1101
        %v1111 = vunpack.c.l.b16 %v832
        %v1112 = vunpack.c.l.b16 %v833
        %v1113 = vunpack.c.l.b16 %v834
        %v1114 = vunpack.c.l.b16 %v835
        %v1115 = vunpack.c.l.b16 %v836
        %v1116 = vunpack.c.l.b16 %v837
        %v1117 = vunpack.c.l.b16 %v838
        %v1118 = vunpack.c.l.b16 %v839
        %v1119 = vrot.slane %v1112, 7
        %v1120 = vsel %vm865, %v1119, %v1111
        %v1121 = vrot.slane %v1113, 6
        %v1122 = vsel %vm868, %v1121, %v1120
        %v1123 = vrot.slane %v1114, 5
        %v1124 = vsel %vm871, %v1123, %v1122
        %v1125 = vrot.slane %v1115, 4
        %v1126 = vsel %vm874, %v1125, %v1124
        %v1127 = vrot.slane %v1116, 3
        %v1128 = vsel %vm877, %v1127, %v1126
        %v1129 = vrot.slane %v1117, 2
        %v1130 = vsel %vm880, %v1129, %v1128
        %v1131 = vrot.slane %v1118, 1
        %v1132 = vsel %vm883, %v1131, %v1130
        %v1133 = vpack.c.b16 %v1132, %v1132
        %v1135 = vsel %vm917, %v1102, 0
        %v1138 = vsel %vm917, %v1133, 0
        %1140 = vmatprep.subr.bf16.mxu0 0
        %1141 = vmatpush1.bf16.xpose.msra.mxu0 %v1138
        %1142 = vmatprep.subr.bf16.mxu0 0
        %1143 = vmatpush1.bf16.xpose.msra.mxu0 0
        %1144 = vmatprep.subr.bf16.mxu0 0
        %1145 = vmatpush1.bf16.xpose.msra.mxu0 0
        %1146 = vmatprep.subr.bf16.mxu0 0
        %1147 = vmatpush1.bf16.xpose.msra.mxu0 0
        %1148 = vmatprep.subr.bf16.mxu0 0
        %1149 = vmatpush1.bf16.xpose.msra.mxu0 0
        %1150 = vmatprep.subr.bf16.mxu0 0
        %1151 = vmatpush1.bf16.xpose.msra.mxu0 0
        %1152 = vmatprep.subr.bf16.mxu0 0
        %1153 = vmatpush1.bf16.xpose.msra.mxu0 0
        %1154 = vmatprep.subr.bf16.mxu0 0
        %1155 = vmatpush1.bf16.xpose.msra.mxu0 0
        %1156 = vmatprep.subr.bf16.mxu0 0
        %1157 = vmatpush1.bf16.xpose.msra.mxu0 0
        %1158 = vmatprep.subr.bf16.mxu0 0
        %1159 = vmatpush1.bf16.xpose.msra.mxu0 0
        %1160 = vmatprep.subr.bf16.mxu0 0
        %1161 = vmatpush1.bf16.xpose.msra.mxu0 0
        %1162 = vmatprep.subr.bf16.mxu0 0
        %1163 = vmatpush1.bf16.xpose.msra.mxu0 0
        %1164 = vmatprep.subr.bf16.mxu0 0
        %1165 = vmatpush1.bf16.xpose.msra.mxu0 0
        %1166 = vmatprep.subr.bf16.mxu0 0
        %1167 = vmatpush1.bf16.xpose.msra.mxu0 0
        %1168 = vmatprep.subr.bf16.mxu0 0
        %1169 = vmatpush1.bf16.xpose.msra.mxu0 0
        %1170 = vmatprep.subr.bf16.mxu0 0
        %1171 = vmatpush1.bf16.xpose.msra.mxu0 0
        %1172 = vmatprep.mubr.bf16.mxu0 0
        %1173 = vmatmul.mubr.bf16.gmra.mrb[0].mxu0 %v1135
        %v1174 = vpop.f32.mrb[0].mxu0
        %v1175 = vadd.f32 0.0, %v1174
        %v1176 = vpop.f32.mrb[0].mxu0
        %v1177 = vpop.f32.mrb[0].mxu0
        %v1178 = vpop.f32.mrb[0].mxu0
        %1179 = vdwg.mxu0
        %v1188 = vunpack.c.l.b16 %v620
        %v1189 = vunpack.c.l.b16 %v621
        %v1190 = vunpack.c.l.b16 %v622
        %v1191 = vunpack.c.l.b16 %v623
        %v1192 = vunpack.c.l.b16 %v624
        %v1193 = vunpack.c.l.b16 %v625
        %v1194 = vunpack.c.l.b16 %v626
        %v1195 = vunpack.c.l.b16 %v627
        %v1196 = vrot.slane %v1189, 7
        %v1197 = vsel %vm865, %v1196, %v1188
        %v1198 = vrot.slane %v1190, 6
        %v1199 = vsel %vm868, %v1198, %v1197
        %v1200 = vrot.slane %v1191, 5
        %v1201 = vsel %vm871, %v1200, %v1199
        %v1202 = vrot.slane %v1192, 4
        %v1203 = vsel %vm874, %v1202, %v1201
        %v1204 = vrot.slane %v1193, 3
        %v1205 = vsel %vm877, %v1204, %v1203
        %v1206 = vrot.slane %v1194, 2
        %v1207 = vsel %vm880, %v1206, %v1205
        %v1208 = vrot.slane %v1195, 1
        %v1209 = vsel %vm883, %v1208, %v1207
        %v1210 = vpack.c.b16 %v1209, %v1209
        %v1219 = vunpack.c.l.b16 %v840
        %v1220 = vunpack.c.l.b16 %v841
        %v1221 = vunpack.c.l.b16 %v842
        %v1222 = vunpack.c.l.b16 %v843
        %v1223 = vunpack.c.l.b16 %v844
        %v1224 = vunpack.c.l.b16 %v845
        %v1225 = vunpack.c.l.b16 %v846
        %v1226 = vunpack.c.l.b16 %v847
        %v1227 = vrot.slane %v1220, 7
        %v1228 = vsel %vm865, %v1227, %v1219
        %v1229 = vrot.slane %v1221, 6
        %v1230 = vsel %vm868, %v1229, %v1228
        %v1231 = vrot.slane %v1222, 5
        %v1232 = vsel %vm871, %v1231, %v1230
        %v1233 = vrot.slane %v1223, 4
        %v1234 = vsel %vm874, %v1233, %v1232
        %v1235 = vrot.slane %v1224, 3
        %v1236 = vsel %vm877, %v1235, %v1234
        %v1237 = vrot.slane %v1225, 2
        %v1238 = vsel %vm880, %v1237, %v1236
        %v1239 = vrot.slane %v1226, 1
        %v1240 = vsel %vm883, %v1239, %v1238
        %v1241 = vpack.c.b16 %v1240, %v1240
        %v1243 = vsel %vm917, %v1210, 0
        %v1246 = vsel %vm917, %v1241, 0
        %1248 = vmatprep.subr.bf16.mxu0 0
        %1249 = vmatpush1.bf16.xpose.msra.mxu0 %v1246
        %1250 = vmatprep.subr.bf16.mxu0 0
        %1251 = vmatpush1.bf16.xpose.msra.mxu0 0
        %1252 = vmatprep.subr.bf16.mxu0 0
        %1253 = vmatpush1.bf16.xpose.msra.mxu0 0
        %1254 = vmatprep.subr.bf16.mxu0 0
        %1255 = vmatpush1.bf16.xpose.msra.mxu0 0
        %1256 = vmatprep.subr.bf16.mxu0 0
        %1257 = vmatpush1.bf16.xpose.msra.mxu0 0
        %1258 = vmatprep.subr.bf16.mxu0 0
        %1259 = vmatpush1.bf16.xpose.msra.mxu0 0
        %1260 = vmatprep.subr.bf16.mxu0 0
        %1261 = vmatpush1.bf16.xpose.msra.mxu0 0
        %1262 = vmatprep.subr.bf16.mxu0 0
        %1263 = vmatpush1.bf16.xpose.msra.mxu0 0
        %1264 = vmatprep.subr.bf16.mxu0 0
        %1265 = vmatpush1.bf16.xpose.msra.mxu0 0
        %1266 = vmatprep.subr.bf16.mxu0 0
        %1267 = vmatpush1.bf16.xpose.msra.mxu0 0
        %1268 = vmatprep.subr.bf16.mxu0 0
        %1269 = vmatpush1.bf16.xpose.msra.mxu0 0
        %1270 = vmatprep.subr.bf16.mxu0 0
        %1271 = vmatpush1.bf16.xpose.msra.mxu0 0
        %1272 = vmatprep.subr.bf16.mxu0 0
        %1273 = vmatpush1.bf16.xpose.msra.mxu0 0
        %1274 = vmatprep.subr.bf16.mxu0 0
        %1275 = vmatpush1.bf16.xpose.msra.mxu0 0
        %1276 = vmatprep.subr.bf16.mxu0 0
        %1277 = vmatpush1.bf16.xpose.msra.mxu0 0
        %1278 = vmatprep.subr.bf16.mxu0 0
        %1279 = vmatpush1.bf16.xpose.msra.mxu0 0
        %1280 = vmatprep.mubr.bf16.mxu0 0
        %1281 = vmatmul.mubr.bf16.gmra.mrb[0].mxu0 %v1243
        %v1282 = vpop.f32.mrb[0].mxu0
        %v1283 = vadd.f32 0.0, %v1282
        %v1284 = vpop.f32.mrb[0].mxu0
        %v1285 = vpop.f32.mrb[0].mxu0
        %v1286 = vpop.f32.mrb[0].mxu0
        %1287 = vdwg.mxu0
        %vm1288 = vcmask 64512
        %v1289 = vsel %vm1288, %v959, -inf
        %1290 = vmax.xlane.f32.xlu0 %v1289
        %v1291 = vpop.xlane.xlu0 %1290
        %v1292 = vsel %vm1288, %v1067, -inf
        %1293 = vmax.xlane.f32.xlu0 %v1292
        %v1294 = vpop.xlane.xlu0 %1293
        %v1295 = vsel %vm1288, %v1175, -inf
        %1296 = vmax.xlane.f32.xlu0 %v1295
        %v1297 = vpop.xlane.xlu0 %1296
        %v1298 = vsel %vm1288, %v1283, -inf
        %1299 = vmax.xlane.f32.xlu0 %v1298
        %v1300 = vpop.xlane.xlu0 %1299
        %v1301 = vsub.f32 %v959, %v1291
        %v1302 = vsub.f32 %v1067, %v1294
        %v1303 = vsub.f32 %v1175, %v1297
        %v1304 = vsub.f32 %v1283, %v1300
        %v1305 = vmul.f32 %v1301, 1.442695
        %v1306 = vpow.pop %v1305
        %v1307 = vmul.f32 %v1302, 1.442695
        %v1308 = vpow.pop %v1307
        %v1309 = vmul.f32 %v1303, 1.442695
        %v1310 = vpow.pop %v1309
        %v1311 = vmul.f32 %v1304, 1.442695
        %v1312 = vpow.pop %v1311
        %v1313 = vsel %vm1288, %v1306, 0.0
        %1314 = vadd.xlane.f32.xlu0 %v1313
        %v1315 = vpop.xlane.xlu0 %1314
        %v1316 = vsel %vm1288, %v1308, 0.0
        %1317 = vadd.xlane.f32.xlu0 %v1316
        %v1318 = vpop.xlane.xlu0 %1317
        %v1319 = vsel %vm1288, %v1310, 0.0
        %1320 = vadd.xlane.f32.xlu0 %v1319
        %v1321 = vpop.xlane.xlu0 %1320
        %v1322 = vsel %vm1288, %v1312, 0.0
        %1323 = vadd.xlane.f32.xlu0 %v1322
        %v1324 = vpop.xlane.xlu0 %1323
        %v1325 = vrcp.pop %v1315
        %v1326 = vmul.f32 %v1306, %v1325
        %v1327 = vrcp.pop %v1318
        %v1328 = vmul.f32 %v1308, %v1327
        %v1329 = vrcp.pop %v1321
        %v1330 = vmul.f32 %v1310, %v1329
        %v1331 = vrcp.pop %v1324
        %v1332 = vmul.f32 %v1312, %v1331
        %v1333 = vand.u32 2147483647, %v1326
        %v1334 = vand.u32 2147483647, %v1328
        %v1335 = vand.u32 2147483647, %v1330
        %v1336 = vand.u32 2147483647, %v1332
        %v1337 = vsel %vm1288, %v1333, 0.0
        %1338 = vadd.xlane.f32.xlu0 %v1337
        %v1339 = vpop.xlane.xlu0 %1338
        %v1340 = vsel %vm1288, %v1334, 0.0
        %1341 = vadd.xlane.f32.xlu0 %v1340
        %v1342 = vpop.xlane.xlu0 %1341
        %v1343 = vsel %vm1288, %v1335, 0.0
        %1344 = vadd.xlane.f32.xlu0 %v1343
        %v1345 = vpop.xlane.xlu0 %1344
        %v1346 = vsel %vm1288, %v1336, 0.0
        %1347 = vadd.xlane.f32.xlu0 %v1346
        %v1348 = vpop.xlane.xlu0 %1347
        %v1349 = vrot.slane %v1337, 4
        %v1350 = vadd.f32 %v1337, %v1349
        %v1351 = vrot.slane %v1350, 2
        %v1352 = vadd.f32 %v1350, %v1351
        %v1353 = vrot.slane %v1352, 1
        %v1354 = vadd.f32 %v1352, %v1353
        %v1355 = vrot.slane %v1340, 4
        %v1356 = vadd.f32 %v1340, %v1355
        %v1357 = vrot.slane %v1356, 2
        %v1358 = vadd.f32 %v1356, %v1357
        %v1359 = vrot.slane %v1358, 1
        %v1360 = vadd.f32 %v1358, %v1359
        %v1361 = vrot.slane %v1343, 4
        %v1362 = vadd.f32 %v1343, %v1361
        %v1363 = vrot.slane %v1362, 2
        %v1364 = vadd.f32 %v1362, %v1363
        %v1365 = vrot.slane %v1364, 1
        %v1366 = vadd.f32 %v1364, %v1365
        %v1367 = vrot.slane %v1346, 4
        %v1368 = vadd.f32 %v1346, %v1367
        %v1369 = vrot.slane %v1368, 2
        %v1370 = vadd.f32 %v1368, %v1369
        %v1371 = vrot.slane %v1370, 1
        %v1372 = vadd.f32 %v1370, %v1371
        %v1377 = vlaneseq
        %v1378 = vand.u32 %v1377, 127
        %v1379 = vlaneseq
        %v1380 = vshrl.u32 %v1379, 7
        %v1381 = vsub.s32 %v1378, %v1380
        %v1382 = vrot.slane %v1339, %v1381
        %v1383 = vlaneseq
        %v1384 = vshrl.u32 %v1383, 7
        %v1385 = vsub.s32 %v1378, %v1384
        %v1386 = vrot.slane %v1342, %v1385
        %v1387 = vlaneseq
        %v1388 = vshrl.u32 %v1387, 7
        %v1389 = vsub.s32 %v1378, %v1388
        %v1390 = vrot.slane %v1345, %v1389
        %v1391 = vlaneseq
        %v1392 = vshrl.u32 %v1391, 7
        %v1393 = vsub.s32 %v1378, %v1392
        %v1394 = vrot.slane %v1348, %v1393
        %v1395 = vsel %vm865, %v1386, %v1382
        %v1396 = vsel %vm868, %v1390, %v1395
        %v1397 = vsel %vm871, %v1394, %v1396
        %vm1399 = vcmask 60416
        %v1400 = vsel %vm1399, %v1397, -inf
        %1401 = vmax.xlane.f32.xlu0 %v1400
        %v1402 = vpop.xlane.xlu0 %1401
        %vm1403 = vcmask 1043456
        %v1404 = vsel %vm1403, %v1402, -inf
        %v1405 = vrot.slane %v1404, 4
        %v1406 = vmax.f32 %v1404, %v1405
        %v1407 = vrot.slane %v1406, 2
        %v1408 = vmax.f32 %v1406, %v1407
        %v1409 = vrot.slane %v1408, 1
        %v1410 = vmax.f32 %v1408, %v1409
        %v1415 = vsel %vm865, %v1360, %v1354
        %v1416 = vsel %vm868, %v1366, %v1415
        %v1417 = vsel %vm871, %v1372, %v1416
        %v1419 = vsel %vm1399, %v1417, -inf
        %1420 = vmax.xlane.f32.xlu0 %v1419
        %v1421 = vpop.xlane.xlu0 %1420
        %v1422 = vsel %vm1403, %v1421, -inf
        %v1423 = vrot.slane %v1422, 4
        %v1424 = vmax.f32 %v1422, %v1423
        %v1425 = vrot.slane %v1424, 2
        %v1426 = vmax.f32 %v1424, %v1425
        %v1427 = vrot.slane %v1426, 1
        %v1428 = vmax.f32 %v1426, %v1427
        %vm1429 = vcmask 0
        %1430 = vst.msk [vmem:[%s248] sm:$0x1] %vm1429, %v1410
        %1431 = vst.msk [vmem:[%s251] sm:$0x1] %vm1429, %v1428
        %p1432 = scmp.lt.s32.totalorder %s20, 1
        %s1433 = scalar_select %p1432, %s20, 1
        %s1434 = scalar_lea.vmem %s3, %s1433
        %p1435 = scmp.lt.s32.totalorder %s20, 1
        %s1436 = scalar_select %p1435, %s20, 1
        %s1437 = scalar_lea.vmem %s4, %s1436
        // Predicated region
        $region45: #{tpu_custom_call.1} parent=31 // pred_check
          %p1438 = pneg %p106
        $region46: #{tpu_custom_call.1} parent=31 // pred_check_branch
          %1440 = sbr.rel (%p1438) target = $region48
        $region47: #{tpu_custom_call.1} parent=31 // pred_region
          _
        $region48: #{tpu_custom_call.1} parent=31 // pred_fallthru
          _
        // Predicated region
        $region49: #{tpu_custom_call.1} parent=31 // pred_check
          %p1441 = pneg %p132
        $region50: #{tpu_custom_call.1} parent=31 // pred_check_branch
          %1443 = sbr.rel (%p1441) target = $region52
        $region51: #{tpu_custom_call.1} parent=31 // pred_region
          _
        $region52: #{tpu_custom_call.1} parent=31 // pred_fallthru
          _
      $region32: #{tpu_custom_call.1} parent=5 // pred_fallthru
        _
      %p1444 = scmp.le.s32.totalorder 2, %s15
      // Predicated region
      $region53: #{tpu_custom_call.1} parent=5 // pred_check
        %p1445 = pneg %p1444
      $region54: #{tpu_custom_call.1} parent=5 // pred_check_branch
        %1447 = sbr.rel (%p1445) target = $region56
      $region55: #{tpu_custom_call.1} parent=5 // pred_region
        %s1448 = ssub.s32 %s15, 2
        // Predicated region
        $region57: #{tpu_custom_call.1} parent=55 // pred_check
          %p1449 = pneg %p112
        $region58: #{tpu_custom_call.1} parent=55 // pred_check_branch
          %1451 = sbr.rel (%p1449) target = $region60
        $region59: #{tpu_custom_call.1} parent=55 // pred_region
          %p1452 = scmp.lt.s32.totalorder %s21, 1
          %s1453 = scalar_select %p1452, %s21, 1
          %s1454 = scalar_lea.vmem %s3, %s1453
        $region60: #{tpu_custom_call.1} parent=55 // pred_fallthru
          _
        // Predicated region
        $region61: #{tpu_custom_call.1} parent=55 // pred_check
          %p1455 = pneg %p138
        $region62: #{tpu_custom_call.1} parent=55 // pred_check_branch
          %1457 = sbr.rel (%p1455) target = $region64
        $region63: #{tpu_custom_call.1} parent=55 // pred_region
          %p1458 = scmp.lt.s32.totalorder %s21, 1
          %s1459 = scalar_select %p1458, %s21, 1
          %s1460 = scalar_lea.vmem %s4, %s1459
        $region64: #{tpu_custom_call.1} parent=55 // pred_fallthru
          _
      $region56: #{tpu_custom_call.1} parent=5 // pred_fallthru
        _
    $region6: #{tpu_custom_call.1} parent=1 // loop_footer
      %s19 = sadd.s32 1, %s15
    $region7: #{tpu_custom_call.1} parent=1 // loop_footer_branch
      %14 = sbr.rel target = $region3
    $region8: #{tpu_custom_call.1} parent=1 // loop_exit
      _
    %1461 = vsyncpa [#allocation3], 1
    %s1462 = scalar_lea.sflag [#allocation3], 1
    %1463 = vsyncpa %s1462, 1
    %1464 = vsyncpa [#allocation5], 1

</llo_original>
